<compile_context>
chip_gen: v7x
topology: tpu7x:2x2x1
jax: 0.10.0
libtpu: 0.0.40
codegen_flags: <defaults>
</compile_context>

<pallas_src>
import functools

import jax
import jax.numpy as jnp
from jax.experimental import pallas as pl
from jax.experimental.pallas import tpu as pltpu

FMNIST_INPUT_SIZE = 784
HIDDEN_LAYER_SIZE_1 = 512
HIDDEN_LAYER_SIZE_2 = 256
OUT_SIZE = FMNIST_INPUT_SIZE + 10          # 794 (module's true output width)
OUT_PADDED = 896                           # 7 * 128, lane-dense


def _round_up(x, m):
    return (x + m - 1) // m * m


def _decoder_kernel(x_ref, w1_ref, b1_ref, w2_ref, b2_ref, w3_ref, b3_ref, o_ref):
    # x / weights are bf16; biases and output are f32. Matmuls accumulate f32.
    x = x_ref[...]

    h1 = jnp.dot(x, w1_ref[...], preferred_element_type=jnp.float32) + b1_ref[...]
    h1 = jnp.maximum(h1, 0.0)                                    # ReLU (f32)

    h2 = jnp.dot(h1.astype(jnp.bfloat16), w2_ref[...],
                 preferred_element_type=jnp.float32) + b2_ref[...]
    h2 = jnp.maximum(h2, 0.0)                                    # ReLU (f32)

    z = jnp.dot(h2.astype(jnp.bfloat16), w3_ref[...],
                preferred_element_type=jnp.float32) + b3_ref[...]
    o_ref[...] = jax.nn.sigmoid(z)                               # sigmoid (f32)


@functools.partial(jax.jit, static_argnames=("tile_m",))
def vae_classifier_decoder(x, params, *, tile_m=None):
    """x: (B, dim_encoding) float32. Returns (B, 794) float32."""
    w1, b1, w2, b2, w3, b3 = params
    B, D = x.shape

    if tile_m is None:
        # 256 rows keeps the MXU busy for large batches; otherwise one
        # 8-aligned tile covering the whole (small) batch.
        tile_m = 256 if B >= 256 else _round_up(max(B, 1), 8)
    Bp = _round_up(B, tile_m)

    # Pad the latent dim to a lane-dense multiple of 128 (zero rows in w1 keep
    # results identical) and cast everything feeding the MXU to bf16.
    Dp = _round_up(max(D, 1), 128)
    xb = jnp.pad(x, ((0, Bp - B), (0, Dp - D))).astype(jnp.bfloat16)
    w1b = jnp.pad(w1, ((0, Dp - D), (0, 0))).astype(jnp.bfloat16)
    w2b = w2.astype(jnp.bfloat16)

    # Pad fc3 columns 794 -> 896 (lane-dense MXU pass + unmasked stores).
    pad_n = OUT_PADDED - OUT_SIZE
    w3b = jnp.pad(w3, ((0, 0), (0, pad_n))).astype(jnp.bfloat16)
    b3p = jnp.pad(b3, ((0, 0), (0, pad_n)))

    grid = (Bp // tile_m,)

    def const2d(shape):  # weights/biases: same block every grid step -> resident
        return pl.BlockSpec(shape, lambda i: (0, 0))

    flops = 2 * Bp * (Dp * HIDDEN_LAYER_SIZE_2
                      + HIDDEN_LAYER_SIZE_2 * HIDDEN_LAYER_SIZE_1
                      + HIDDEN_LAYER_SIZE_1 * OUT_PADDED)
    bytes_accessed = ((xb.size + w1b.size + w2b.size + w3b.size) * 2    # bf16
                      + (b1.size + b2.size + b3p.size) * 4              # f32
                      + Bp * OUT_PADDED * 4)                            # f32 out
    cost = pl.CostEstimate(flops=flops,
                           transcendentals=Bp * OUT_PADDED,
                           bytes_accessed=bytes_accessed)

    out = pl.pallas_call(
        _decoder_kernel,
        out_shape=jax.ShapeDtypeStruct((Bp, OUT_PADDED), jnp.float32),
        grid=grid,
        in_specs=[
            pl.BlockSpec((tile_m, Dp), lambda i: (i, 0)),     # x tiles stream
            const2d(w1b.shape), const2d(b1.shape),
            const2d(w2b.shape), const2d(b2.shape),
            const2d(w3b.shape), const2d(b3p.shape),
        ],
        out_specs=pl.BlockSpec((tile_m, OUT_PADDED), lambda i: (i, 0)),
        compiler_params=pltpu.CompilerParams(
            dimension_semantics=("parallel",),
            vmem_limit_bytes=16 << 20,
        ),
        cost_estimate=cost,
    )(xb, w1b, b1, w2b, b2, w3b, b3p)

    # Strip batch padding and the 794->896 column padding.
    return out[:B, :OUT_SIZE]


def init_params(key, dim_encoding):
    """nn.Linear-style U(-1/sqrt(fan_in), 1/sqrt(fan_in)) init.

    Weights stored as (in_features, out_features); biases as (1, out) so they
    broadcast over the batch inside the kernel.
    """
    def linear(key, fan_in, fan_out):
        kw, kb = jax.random.split(key)
        bound = 1.0 / jnp.sqrt(fan_in)
        w = jax.random.uniform(kw, (fan_in, fan_out), jnp.float32, -bound, bound)
        b = jax.random.uniform(kb, (1, fan_out), jnp.float32, -bound, bound)
        return w, b

    k1, k2, k3 = jax.random.split(key, 3)
    w1, b1 = linear(k1, dim_encoding, HIDDEN_LAYER_SIZE_2)
    w2, b2 = linear(k2, HIDDEN_LAYER_SIZE_2, HIDDEN_LAYER_SIZE_1)
    w3, b3 = linear(k3, HIDDEN_LAYER_SIZE_1, OUT_SIZE)
    return (w1, b1, w2, b2, w3, b3)


def reference_bf16(x, params):
    """Pure-JAX reference with the same bf16 casts the kernel uses."""
    w1, b1, w2, b2, w3, b3 = params
    bf = jnp.bfloat16
    h1 = jax.nn.relu(jnp.dot(x.astype(bf), w1.astype(bf),
                             preferred_element_type=jnp.float32) + b1)
    h2 = jax.nn.relu(jnp.dot(h1.astype(bf), w2.astype(bf),
                             preferred_element_type=jnp.float32) + b2)
    return jax.nn.sigmoid(jnp.dot(h2.astype(bf), w3.astype(bf),
                                  preferred_element_type=jnp.float32) + b3)


def reference_f32(x, params):
    w1, b1, w2, b2, w3, b3 = params
    h1 = jax.nn.relu(x @ w1 + b1)
    h2 = jax.nn.relu(h1 @ w2 + b2)
    return jax.nn.sigmoid(h2 @ w3 + b3)


if __name__ == "__main__":
    key = jax.random.PRNGKey(0)
    k_params, k_x, k_x2 = jax.random.split(key, 3)

    batch = 8
    dim_encoding = 16  # small latent dimension

    params = init_params(k_params, dim_encoding)
    x = jax.random.normal(k_x, (batch, dim_encoding), jnp.float32)

    out = vae_classifier_decoder(x, params)
    out = jax.block_until_ready(out)
    assert out.shape == (batch, OUT_SIZE)

    # Match the bf16-weight reference closely; stay within bf16 quantization
    # error of the original f32 module semantics.
    ref_bf16 = reference_bf16(x, params)
    assert jnp.allclose(out, ref_bf16, atol=1e-2, rtol=1e-2), "mismatch vs bf16 reference"
    ref_f32 = reference_f32(x, params)
    assert jnp.allclose(out, ref_f32, atol=3e-2, rtol=3e-2), "mismatch vs f32 reference"

    # Exercise the multi-tile grid path (streams x/out tiles, batch padding).
    batch2 = 300
    x2 = jax.random.normal(k_x2, (batch2, dim_encoding), jnp.float32)
    out2 = jax.block_until_ready(vae_classifier_decoder(x2, params))
    assert out2.shape == (batch2, OUT_SIZE)
    assert jnp.allclose(out2, reference_f32(x2, params), atol=3e-2, rtol=3e-2), \
        "mismatch vs f32 reference (multi-tile)"

    # Glue matching the module's documented usage: split into image + labels.
    img = out[:, :FMNIST_INPUT_SIZE].reshape(batch, 1, 28, 28)
    labels = out[:, FMNIST_INPUT_SIZE:]
    assert img.shape == (batch, 1, 28, 28) and labels.shape == (batch, 10)

    print("KERNEL_OK")
</pallas_src>

<mosaic_0001>
module attributes {stable_mosaic.version = 11 : i64} {
  func.func @_decoder_kernel(%arg0: i32, %arg1: memref<8x128xbf16, #tpu.memory_space<vmem>>, %arg2: memref<128x256xbf16, #tpu.memory_space<vmem>>, %arg3: memref<1x256xf32, #tpu.memory_space<vmem>>, %arg4: memref<256x512xbf16, #tpu.memory_space<vmem>>, %arg5: memref<1x512xf32, #tpu.memory_space<vmem>>, %arg6: memref<512x896xbf16, #tpu.memory_space<vmem>>, %arg7: memref<1x896xf32, #tpu.memory_space<vmem>>, %arg8: memref<8x896xf32, #tpu.memory_space<vmem>>) attributes {dimension_semantics = [#tpu.dimension_semantics<parallel>], iteration_bounds = array<i64: 1>, scalar_prefetch = 0 : i64, scratch_operands = 0 : i64, tpu.core_type = #tpu.core_type<tc>, window_params = [{transform_indices = @transform_0, window_bounds = array<i64: 8, 128>}, {pipeline_mode = #tpu.pipeline_mode<synchronous>, transform_indices = @transform_1, window_bounds = array<i64: 128, 256>}, {pipeline_mode = #tpu.pipeline_mode<synchronous>, transform_indices = @transform_2, window_bounds = array<i64: 1, 256>}, {pipeline_mode = #tpu.pipeline_mode<synchronous>, transform_indices = @transform_3, window_bounds = array<i64: 256, 512>}, {pipeline_mode = #tpu.pipeline_mode<synchronous>, transform_indices = @transform_4, window_bounds = array<i64: 1, 512>}, {pipeline_mode = #tpu.pipeline_mode<synchronous>, transform_indices = @transform_5, window_bounds = array<i64: 512, 896>}, {pipeline_mode = #tpu.pipeline_mode<synchronous>, transform_indices = @transform_6, window_bounds = array<i64: 1, 896>}, {transform_indices = @transform_7, window_bounds = array<i64: 8, 896>}]} {
    %c0 = arith.constant 0 : index
    %c0_0 = arith.constant 0 : index
    %0 = vector.load %arg1[%c0, %c0_0] : memref<8x128xbf16, #tpu.memory_space<vmem>>, vector<8x128xbf16>
    %c0_1 = arith.constant 0 : index
    %c0_2 = arith.constant 0 : index
    %1 = vector.load %arg2[%c0_1, %c0_2] : memref<128x256xbf16, #tpu.memory_space<vmem>>, vector<128x256xbf16>
    %cst = arith.constant dense<0.000000e+00> : vector<8x256xf32>
    %2 = tpu.matmul %0, %1, %cst {dimension_numbers = #tpu.dot_dimension_numbers<[1], [0], [0], [1], [0, 0, 1, 1], [], []>} : vector<8x128xbf16>, vector<128x256xbf16>, vector<8x256xf32> -> vector<8x256xf32>
    %c0_3 = arith.constant 0 : index
    %c0_4 = arith.constant 0 : index
    %3 = vector.load %arg3[%c0_3, %c0_4] : memref<1x256xf32, #tpu.memory_space<vmem>>, vector<1x256xf32>
    %4 = vector.broadcast %3 : vector<1x256xf32> to vector<8x256xf32>
    %5 = arith.addf %2, %4 : vector<8x256xf32>
    %cst_5 = arith.constant 0.000000e+00 : f32
    %6 = vector.broadcast %cst_5 : f32 to vector<8x256xf32>
    %7 = arith.maximumf %5, %6 : vector<8x256xf32>
    %8 = arith.truncf %7 : vector<8x256xf32> to vector<8x256xbf16>
    %c0_6 = arith.constant 0 : index
    %c0_7 = arith.constant 0 : index
    %9 = vector.load %arg4[%c0_6, %c0_7] : memref<256x512xbf16, #tpu.memory_space<vmem>>, vector<256x512xbf16>
    %cst_8 = arith.constant dense<0.000000e+00> : vector<8x512xf32>
    %10 = tpu.matmul %8, %9, %cst_8 {dimension_numbers = #tpu.dot_dimension_numbers<[1], [0], [0], [1], [0, 0, 1, 1], [], []>} : vector<8x256xbf16>, vector<256x512xbf16>, vector<8x512xf32> -> vector<8x512xf32>
    %c0_9 = arith.constant 0 : index
    %c0_10 = arith.constant 0 : index
    %11 = vector.load %arg5[%c0_9, %c0_10] : memref<1x512xf32, #tpu.memory_space<vmem>>, vector<1x512xf32>
    %12 = vector.broadcast %11 : vector<1x512xf32> to vector<8x512xf32>
    %13 = arith.addf %10, %12 : vector<8x512xf32>
    %cst_11 = arith.constant 0.000000e+00 : f32
    %14 = vector.broadcast %cst_11 : f32 to vector<8x512xf32>
    %15 = arith.maximumf %13, %14 : vector<8x512xf32>
    %16 = arith.truncf %15 : vector<8x512xf32> to vector<8x512xbf16>
    %c0_12 = arith.constant 0 : index
    %c0_13 = arith.constant 0 : index
    %17 = vector.load %arg6[%c0_12, %c0_13] : memref<512x896xbf16, #tpu.memory_space<vmem>>, vector<512x896xbf16>
    %cst_14 = arith.constant dense<0.000000e+00> : vector<8x896xf32>
    %18 = tpu.matmul %16, %17, %cst_14 {dimension_numbers = #tpu.dot_dimension_numbers<[1], [0], [0], [1], [0, 0, 1, 1], [], []>} : vector<8x512xbf16>, vector<512x896xbf16>, vector<8x896xf32> -> vector<8x896xf32>
    %c0_15 = arith.constant 0 : index
    %c0_16 = arith.constant 0 : index
    %19 = vector.load %arg7[%c0_15, %c0_16] : memref<1x896xf32, #tpu.memory_space<vmem>>, vector<1x896xf32>
    %20 = vector.broadcast %19 : vector<1x896xf32> to vector<8x896xf32>
    %21 = arith.addf %18, %20 : vector<8x896xf32>
    %22 = arith.negf %21 : vector<8x896xf32>
    %23 = math.exp %22 : vector<8x896xf32>
    %cst_17 = arith.constant 1.000000e+00 : f32
    %24 = vector.broadcast %cst_17 : f32 to vector<8x896xf32>
    %25 = arith.addf %24, %23 : vector<8x896xf32>
    %26 = arith.divf %24, %25 : vector<8x896xf32>
    %c0_18 = arith.constant 0 : index
    %c0_19 = arith.constant 0 : index
    %27 = vector.load %arg8[%c0_18, %c0_19] : memref<8x896xf32, #tpu.memory_space<vmem>>, vector<8x896xf32>
    tpu.vector_store %arg8[%c0_18, %c0_19], %26 {strides = array<i32>} : memref<8x896xf32, #tpu.memory_space<vmem>>, vector<8x896xf32>,
    return
  }
  func.func @transform_0(%arg0: i32) -> (i32, i32) {
    %c0_i32 = arith.constant 0 : i32
    %c0_i32_0 = arith.constant 0 : i32
    return %arg0, %c0_i32 : i32, i32
  }
  func.func @transform_1(%arg0: i32) -> (i32, i32) {
    %c0_i32 = arith.constant 0 : i32
    %c0_i32_0 = arith.constant 0 : i32
    %c0_i32_1 = arith.constant 0 : i32
    return %c0_i32, %c0_i32_0 : i32, i32
  }
  func.func @transform_2(%arg0: i32) -> (i32, i32) {
    %c0_i32 = arith.constant 0 : i32
    %c0_i32_0 = arith.constant 0 : i32
    %c0_i32_1 = arith.constant 0 : i32
    return %c0_i32, %c0_i32_0 : i32, i32
  }
  func.func @transform_3(%arg0: i32) -> (i32, i32) {
    %c0_i32 = arith.constant 0 : i32
    %c0_i32_0 = arith.constant 0 : i32
    %c0_i32_1 = arith.constant 0 : i32
    return %c0_i32, %c0_i32_0 : i32, i32
  }
  func.func @transform_4(%arg0: i32) -> (i32, i32) {
    %c0_i32 = arith.constant 0 : i32
    %c0_i32_0 = arith.constant 0 : i32
    %c0_i32_1 = arith.constant 0 : i32
    return %c0_i32, %c0_i32_0 : i32, i32
  }
  func.func @transform_5(%arg0: i32) -> (i32, i32) {
    %c0_i32 = arith.constant 0 : i32
    %c0_i32_0 = arith.constant 0 : i32
    %c0_i32_1 = arith.constant 0 : i32
    return %c0_i32, %c0_i32_0 : i32, i32
  }
  func.func @transform_6(%arg0: i32) -> (i32, i32) {
    %c0_i32 = arith.constant 0 : i32
    %c0_i32_0 = arith.constant 0 : i32
    %c0_i32_1 = arith.constant 0 : i32
    return %c0_i32, %c0_i32_0 : i32, i32
  }
  func.func @transform_7(%arg0: i32) -> (i32, i32) {
    %c0_i32 = arith.constant 0 : i32
    %c0_i32_0 = arith.constant 0 : i32
    return %arg0, %c0_i32 : i32, i32
  }
}

</mosaic_0001>

<llo_original>
// kernel: vae_classifier_decoder.1
$region0: #{vae_classifier_decoder.1}
  #allocation0 [shape = 'u32[]', space=smem, size = 0x4, offset = 0x4, fixed_abs, tag = 'smem constant byte address 0x4 - core index']
  #allocation1 [shape = 'u32[144,128]{1,0:T(1,128)}', space=vmem, size = 0x12000, scoped, tag = 'internal scratch']
  %s0 = inlined_call_operand.vmem [shape: bf16[8,128], index: 0, kind: input, shape index: {}]
  %s1 = inlined_call_operand.vmem [shape: bf16[128,256], index: 1, kind: input, shape index: {}]
  %s2 = inlined_call_operand.vmem [shape: f32[1,256], index: 2, kind: input, shape index: {}]
  %s3 = inlined_call_operand.vmem [shape: bf16[256,512], index: 3, kind: input, shape index: {}]
  %s4 = inlined_call_operand.vmem [shape: f32[1,512], index: 4, kind: input, shape index: {}]
  %s5 = inlined_call_operand.vmem [shape: bf16[512,896], index: 5, kind: input, shape index: {}]
  %s6 = inlined_call_operand.vmem [shape: f32[1,896], index: 6, kind: input, shape index: {}]
  %s7 = inlined_call_operand.hbm [shape: f32[8,896], index: 7, kind: output, shape index: {}]
  %s8 = sld [smem:[#allocation0]]
  $region38: #{vae_classifier_decoder.1} parent=0
    _
  %s10 = ssub.s32 1, %s8
  %s11 = scalar_select 0, %s10, %s8
  $region1: #{vae_classifier_decoder.1} parent=0
    #allocation2 [shape = 'u8[28672]{0}', space=vmem, size = 0x7000, scoped, tag = 'output window, operand 0, single buffered']
    #allocation3 [shape = 's32[1]{0}', space=sflag, size = 0x4, scoped, tag = 'scoped memory for vae_classifier_decoder.1']
    %12 = vsyncpa [#allocation3], 0
    // Predicated region
    $region2: #{vae_classifier_decoder.1} parent=1 // pred_check
      _
    $region3: #{vae_classifier_decoder.1} parent=1 // pred_check_branch
      %14 = sbr.rel (0) target = $region5
    $region4: #{vae_classifier_decoder.1} parent=1 // pred_region
      _
    $region5: #{vae_classifier_decoder.1} parent=1 // pred_fallthru
      _
    // Predicated region
    $region6: #{vae_classifier_decoder.1} parent=1 // pred_check
      _
    $region7: #{vae_classifier_decoder.1} parent=1 // pred_check_branch
      %16 = sbr.rel (0) target = $region9
    $region8: #{vae_classifier_decoder.1} parent=1 // pred_region
      _
    $region9: #{vae_classifier_decoder.1} parent=1 // pred_fallthru
      _
    // Predicated region
    $region10: #{vae_classifier_decoder.1} parent=1 // pred_check
      _
    $region11: #{vae_classifier_decoder.1} parent=1 // pred_check_branch
      %18 = sbr.rel (0) target = $region13
    $region12: #{vae_classifier_decoder.1} parent=1 // pred_region
      _
    $region13: #{vae_classifier_decoder.1} parent=1 // pred_fallthru
      _
    // Predicated region
    $region14: #{vae_classifier_decoder.1} parent=1 // pred_check
      _
    $region15: #{vae_classifier_decoder.1} parent=1 // pred_check_branch
      %20 = sbr.rel (0) target = $region17
    $region16: #{vae_classifier_decoder.1} parent=1 // pred_region
      _
    $region17: #{vae_classifier_decoder.1} parent=1 // pred_fallthru
      _
    // Predicated region
    $region18: #{vae_classifier_decoder.1} parent=1 // pred_check
      _
    $region19: #{vae_classifier_decoder.1} parent=1 // pred_check_branch
      %22 = sbr.rel (0) target = $region21
    $region20: #{vae_classifier_decoder.1} parent=1 // pred_region
      _
    $region21: #{vae_classifier_decoder.1} parent=1 // pred_fallthru
      _
    // Predicated region
    $region22: #{vae_classifier_decoder.1} parent=1 // pred_check
      _
    $region23: #{vae_classifier_decoder.1} parent=1 // pred_check_branch
      %24 = sbr.rel (0) target = $region25
    $region24: #{vae_classifier_decoder.1} parent=1 // pred_region
      _
    $region25: #{vae_classifier_decoder.1} parent=1 // pred_fallthru
      _
    // Predicated region
    $region26: #{vae_classifier_decoder.1} parent=1 // pred_check
      _
    $region27: #{vae_classifier_decoder.1} parent=1 // pred_check_branch
      %26 = sbr.rel (0) target = $region29
    $region28: #{vae_classifier_decoder.1} parent=1 // pred_region
      _
    $region29: #{vae_classifier_decoder.1} parent=1 // pred_fallthru
      _
    %v28 = vld [vmem:[%s0] sm:$0xf]
    %v29 = vld [vmem:[%s1] sm:$0xff]
    %v30 = vld [vmem:[%s1 + $0x8] sm:$0xff]
    %v31 = vld [vmem:[%s1 + $0x10] sm:$0xff]
    %v32 = vld [vmem:[%s1 + $0x18] sm:$0xff]
    %v33 = vld [vmem:[%s1 + $0x20] sm:$0xff]
    %v34 = vld [vmem:[%s1 + $0x28] sm:$0xff]
    %v35 = vld [vmem:[%s1 + $0x30] sm:$0xff]
    %v36 = vld [vmem:[%s1 + $0x38] sm:$0xff]
    %v37 = vld [vmem:[%s1 + $0x40] sm:$0xff]
    %v38 = vld [vmem:[%s1 + $0x48] sm:$0xff]
    %v39 = vld [vmem:[%s1 + $0x50] sm:$0xff]
    %v40 = vld [vmem:[%s1 + $0x58] sm:$0xff]
    %v41 = vld [vmem:[%s1 + $0x60] sm:$0xff]
    %v42 = vld [vmem:[%s1 + $0x68] sm:$0xff]
    %v43 = vld [vmem:[%s1 + $0x70] sm:$0xff]
    %v44 = vld [vmem:[%s1 + $0x78] sm:$0xff]
    %v45 = vld [vmem:[%s2] sm:$0x3]
    %v47 = vlaneseq
    %v48 = vshrl.u32 %v47, 7
    %v49 = vsub.s32 0, %v48
    %v50 = vrot.slane %v45, %v49
    %v51 = vlaneseq
    %v52 = vshrl.u32 %v51, 7
    %v53 = vsub.s32 1, %v52
    %v54 = vrot.slane %v45, %v53
    %v73 = vunpack.c.l.b16 %v29
    %v74 = vunpack.c.h.b16 %v29
    %v75 = vunpack.c.l.b16 %v30
    %v76 = vunpack.c.h.b16 %v30
    %v77 = vunpack.c.l.b16 %v31
    %v78 = vunpack.c.h.b16 %v31
    %v79 = vunpack.c.l.b16 %v32
    %v80 = vunpack.c.h.b16 %v32
    %v81 = vunpack.c.l.b16 %v33
    %v82 = vunpack.c.h.b16 %v33
    %v83 = vunpack.c.l.b16 %v34
    %v84 = vunpack.c.h.b16 %v34
    %v85 = vunpack.c.l.b16 %v35
    %v86 = vunpack.c.h.b16 %v35
    %v87 = vunpack.c.l.b16 %v36
    %v88 = vunpack.c.h.b16 %v36
    %v89 = vunpack.c.l.b16 %v37
    %v90 = vunpack.c.h.b16 %v37
    %v91 = vunpack.c.l.b16 %v38
    %v92 = vunpack.c.h.b16 %v38
    %v93 = vunpack.c.l.b16 %v39
    %v94 = vunpack.c.h.b16 %v39
    %v95 = vunpack.c.l.b16 %v40
    %v96 = vunpack.c.h.b16 %v40
    %v97 = vunpack.c.l.b16 %v41
    %v98 = vunpack.c.h.b16 %v41
    %v99 = vunpack.c.l.b16 %v42
    %v100 = vunpack.c.h.b16 %v42
    %v101 = vunpack.c.l.b16 %v43
    %v102 = vunpack.c.h.b16 %v43
    %v103 = vunpack.c.l.b16 %v44
    %v104 = vunpack.c.h.b16 %v44
    %v105 = vpack.c.b16 %v75, %v73
    %v106 = vpack.c.b16 %v76, %v74
    %v107 = vpack.c.b16 %v79, %v77
    %v108 = vpack.c.b16 %v80, %v78
    %v109 = vpack.c.b16 %v83, %v81
    %v110 = vpack.c.b16 %v84, %v82
    %v111 = vpack.c.b16 %v87, %v85
    %v112 = vpack.c.b16 %v88, %v86
    %v113 = vpack.c.b16 %v91, %v89
    %v114 = vpack.c.b16 %v92, %v90
    %v115 = vpack.c.b16 %v95, %v93
    %v116 = vpack.c.b16 %v96, %v94
    %v117 = vpack.c.b16 %v99, %v97
    %v118 = vpack.c.b16 %v100, %v98
    %v119 = vpack.c.b16 %v103, %v101
    %v120 = vpack.c.b16 %v104, %v102
    %137 = vmatprep.subr.bf16.mxu0 %v106
    %138 = vmatpush1.bf16.msra.mxu0 %v105
    %139 = vmatprep.subr.bf16.mxu0 %v108
    %140 = vmatpush1.bf16.msra.mxu0 %v107
    %141 = vmatprep.subr.bf16.mxu0 %v110
    %142 = vmatpush1.bf16.msra.mxu0 %v109
    %143 = vmatprep.subr.bf16.mxu0 %v112
    %144 = vmatpush1.bf16.msra.mxu0 %v111
    %145 = vmatprep.subr.bf16.mxu0 %v114
    %146 = vmatpush1.bf16.msra.mxu0 %v113
    %147 = vmatprep.subr.bf16.mxu0 %v116
    %148 = vmatpush1.bf16.msra.mxu0 %v115
    %149 = vmatprep.subr.bf16.mxu0 %v118
    %150 = vmatpush1.bf16.msra.mxu0 %v117
    %151 = vmatprep.subr.bf16.mxu0 %v120
    %152 = vmatpush1.bf16.msra.mxu0 %v119
    %153 = vmatprep.subr.bf16.mxu0 0
    %154 = vmatpush1.bf16.msra.mxu0 0
    %155 = vmatprep.subr.bf16.mxu0 0
    %156 = vmatpush1.bf16.msra.mxu0 0
    %157 = vmatprep.subr.bf16.mxu0 0
    %158 = vmatpush1.bf16.msra.mxu0 0
    %159 = vmatprep.subr.bf16.mxu0 0
    %160 = vmatpush1.bf16.msra.mxu0 0
    %161 = vmatprep.subr.bf16.mxu0 0
    %162 = vmatpush1.bf16.msra.mxu0 0
    %163 = vmatprep.subr.bf16.mxu0 0
    %164 = vmatpush1.bf16.msra.mxu0 0
    %165 = vmatprep.subr.bf16.mxu0 0
    %166 = vmatpush1.bf16.msra.mxu0 0
    %167 = vmatprep.subr.bf16.mxu0 0
    %168 = vmatpush1.bf16.msra.mxu0 0
    %169 = vmatprep.mubr.bf16.mxu0 0
    %170 = vmatmul.mubr.bf16.gmra.mrb[0].mxu0 %v28
    %v171 = vpop.f32.mrb[0].mxu0
    %v172 = vadd.f32 %v50, %v171
    %v173 = vpop.f32.mrb[0].mxu0
    %v174 = vadd.f32 %v54, %v173
    %v175 = vpop.f32.mrb[0].mxu0
    %v176 = vpop.f32.mrb[0].mxu0
    %177 = vdwg.mxu0
    %v178 = vmax.f32 %v172, 0.0
    %v179 = vmax.f32 %v174, 0.0
    %v180 = vpack.c.bf16 %v178, %v178
    %v181 = vpack.c.bf16 %v179, %v179
    %v182 = vld [vmem:[%s3] sm:$0xff]
    %v183 = vld [vmem:[%s3 + $0x8] sm:$0xff]
    %v184 = vld [vmem:[%s3 + $0x10] sm:$0xff]
    %v185 = vld [vmem:[%s3 + $0x18] sm:$0xff]
    %v186 = vld [vmem:[%s3 + $0x20] sm:$0xff]
    %v187 = vld [vmem:[%s3 + $0x28] sm:$0xff]
    %v188 = vld [vmem:[%s3 + $0x30] sm:$0xff]
    %v189 = vld [vmem:[%s3 + $0x38] sm:$0xff]
    %v190 = vld [vmem:[%s3 + $0x40] sm:$0xff]
    %v191 = vld [vmem:[%s3 + $0x48] sm:$0xff]
    %v192 = vld [vmem:[%s3 + $0x50] sm:$0xff]
    %v193 = vld [vmem:[%s3 + $0x58] sm:$0xff]
    %v194 = vld [vmem:[%s3 + $0x60] sm:$0xff]
    %v195 = vld [vmem:[%s3 + $0x68] sm:$0xff]
    %v196 = vld [vmem:[%s3 + $0x70] sm:$0xff]
    %v197 = vld [vmem:[%s3 + $0x78] sm:$0xff]
    %v198 = vld [vmem:[%s3 + $0x80] sm:$0xff]
    %v199 = vld [vmem:[%s3 + $0x88] sm:$0xff]
    %v200 = vld [vmem:[%s3 + $0x90] sm:$0xff]
    %v201 = vld [vmem:[%s3 + $0x98] sm:$0xff]
    %v202 = vld [vmem:[%s3 + $0xa0] sm:$0xff]
    %v203 = vld [vmem:[%s3 + $0xa8] sm:$0xff]
    %v204 = vld [vmem:[%s3 + $0xb0] sm:$0xff]
    %v205 = vld [vmem:[%s3 + $0xb8] sm:$0xff]
    %v206 = vld [vmem:[%s3 + $0xc0] sm:$0xff]
    %v207 = vld [vmem:[%s3 + $0xc8] sm:$0xff]
    %v208 = vld [vmem:[%s3 + $0xd0] sm:$0xff]
    %v209 = vld [vmem:[%s3 + $0xd8] sm:$0xff]
    %v210 = vld [vmem:[%s3 + $0xe0] sm:$0xff]
    %v211 = vld [vmem:[%s3 + $0xe8] sm:$0xff]
    %v212 = vld [vmem:[%s3 + $0xf0] sm:$0xff]
    %v213 = vld [vmem:[%s3 + $0xf8] sm:$0xff]
    %v214 = vld [vmem:[%s3 + $0x100] sm:$0xff]
    %v215 = vld [vmem:[%s3 + $0x108] sm:$0xff]
    %v216 = vld [vmem:[%s3 + $0x110] sm:$0xff]
    %v217 = vld [vmem:[%s3 + $0x118] sm:$0xff]
    %v218 = vld [vmem:[%s3 + $0x120] sm:$0xff]
    %v219 = vld [vmem:[%s3 + $0x128] sm:$0xff]
    %v220 = vld [vmem:[%s3 + $0x130] sm:$0xff]
    %v221 = vld [vmem:[%s3 + $0x138] sm:$0xff]
    %v222 = vld [vmem:[%s3 + $0x140] sm:$0xff]
    %v223 = vld [vmem:[%s3 + $0x148] sm:$0xff]
    %v224 = vld [vmem:[%s3 + $0x150] sm:$0xff]
    %v225 = vld [vmem:[%s3 + $0x158] sm:$0xff]
    %v226 = vld [vmem:[%s3 + $0x160] sm:$0xff]
    %v227 = vld [vmem:[%s3 + $0x168] sm:$0xff]
    %v228 = vld [vmem:[%s3 + $0x170] sm:$0xff]
    %v229 = vld [vmem:[%s3 + $0x178] sm:$0xff]
    %v230 = vld [vmem:[%s3 + $0x180] sm:$0xff]
    %v231 = vld [vmem:[%s3 + $0x188] sm:$0xff]
    %v232 = vld [vmem:[%s3 + $0x190] sm:$0xff]
    %v233 = vld [vmem:[%s3 + $0x198] sm:$0xff]
    %v234 = vld [vmem:[%s3 + $0x1a0] sm:$0xff]
    %v235 = vld [vmem:[%s3 + $0x1a8] sm:$0xff]
    %v236 = vld [vmem:[%s3 + $0x1b0] sm:$0xff]
    %v237 = vld [vmem:[%s3 + $0x1b8] sm:$0xff]
    %v238 = vld [vmem:[%s3 + $0x1c0] sm:$0xff]
    %v239 = vld [vmem:[%s3 + $0x1c8] sm:$0xff]
    %v240 = vld [vmem:[%s3 + $0x1d0] sm:$0xff]
    %v241 = vld [vmem:[%s3 + $0x1d8] sm:$0xff]
    %v242 = vld [vmem:[%s3 + $0x1e0] sm:$0xff]
    %v243 = vld [vmem:[%s3 + $0x1e8] sm:$0xff]
    %v244 = vld [vmem:[%s3 + $0x1f0] sm:$0xff]
    %v245 = vld [vmem:[%s3 + $0x1f8] sm:$0xff]
    %v246 = vld [vmem:[%s4] sm:$0xf]
    %v248 = vlaneseq
    %v249 = vshrl.u32 %v248, 7
    %v250 = vsub.s32 0, %v249
    %v251 = vrot.slane %v246, %v250
    %v252 = vlaneseq
    %v253 = vshrl.u32 %v252, 7
    %v254 = vsub.s32 1, %v253
    %v255 = vrot.slane %v246, %v254
    %v256 = vlaneseq
    %v257 = vshrl.u32 %v256, 7
    %v258 = vsub.s32 2, %v257
    %v259 = vrot.slane %v246, %v258
    %v260 = vlaneseq
    %v261 = vshrl.u32 %v260, 7
    %v262 = vsub.s32 3, %v261
    %v263 = vrot.slane %v246, %v262
    %v332 = vunpack.c.l.b16 %v182
    %v333 = vunpack.c.h.b16 %v182
    %v334 = vunpack.c.l.b16 %v183
    %v335 = vunpack.c.h.b16 %v183
    %v336 = vunpack.c.l.b16 %v184
    %v337 = vunpack.c.h.b16 %v184
    %v338 = vunpack.c.l.b16 %v185
    %v339 = vunpack.c.h.b16 %v185
    %v340 = vunpack.c.l.b16 %v186
    %v341 = vunpack.c.h.b16 %v186
    %v342 = vunpack.c.l.b16 %v187
    %v343 = vunpack.c.h.b16 %v187
    %v344 = vunpack.c.l.b16 %v188
    %v345 = vunpack.c.h.b16 %v188
    %v346 = vunpack.c.l.b16 %v189
    %v347 = vunpack.c.h.b16 %v189
    %v348 = vunpack.c.l.b16 %v190
    %v349 = vunpack.c.h.b16 %v190
    %v350 = vunpack.c.l.b16 %v191
    %v351 = vunpack.c.h.b16 %v191
    %v352 = vunpack.c.l.b16 %v192
    %v353 = vunpack.c.h.b16 %v192
    %v354 = vunpack.c.l.b16 %v193
    %v355 = vunpack.c.h.b16 %v193
    %v356 = vunpack.c.l.b16 %v194
    %v357 = vunpack.c.h.b16 %v194
    %v358 = vunpack.c.l.b16 %v195
    %v359 = vunpack.c.h.b16 %v195
    %v360 = vunpack.c.l.b16 %v196
    %v361 = vunpack.c.h.b16 %v196
    %v362 = vunpack.c.l.b16 %v197
    %v363 = vunpack.c.h.b16 %v197
    %v364 = vunpack.c.l.b16 %v198
    %v365 = vunpack.c.h.b16 %v198
    %v366 = vunpack.c.l.b16 %v199
    %v367 = vunpack.c.h.b16 %v199
    %v368 = vunpack.c.l.b16 %v200
    %v369 = vunpack.c.h.b16 %v200
    %v370 = vunpack.c.l.b16 %v201
    %v371 = vunpack.c.h.b16 %v201
    %v372 = vunpack.c.l.b16 %v202
    %v373 = vunpack.c.h.b16 %v202
    %v374 = vunpack.c.l.b16 %v203
    %v375 = vunpack.c.h.b16 %v203
    %v376 = vunpack.c.l.b16 %v204
    %v377 = vunpack.c.h.b16 %v204
    %v378 = vunpack.c.l.b16 %v205
    %v379 = vunpack.c.h.b16 %v205
    %v380 = vunpack.c.l.b16 %v206
    %v381 = vunpack.c.h.b16 %v206
    %v382 = vunpack.c.l.b16 %v207
    %v383 = vunpack.c.h.b16 %v207
    %v384 = vunpack.c.l.b16 %v208
    %v385 = vunpack.c.h.b16 %v208
    %v386 = vunpack.c.l.b16 %v209
    %v387 = vunpack.c.h.b16 %v209
    %v388 = vunpack.c.l.b16 %v210
    %v389 = vunpack.c.h.b16 %v210
    %v390 = vunpack.c.l.b16 %v211
    %v391 = vunpack.c.h.b16 %v211
    %v392 = vunpack.c.l.b16 %v212
    %v393 = vunpack.c.h.b16 %v212
    %v394 = vunpack.c.l.b16 %v213
    %v395 = vunpack.c.h.b16 %v213
    %v396 = vunpack.c.l.b16 %v214
    %v397 = vunpack.c.h.b16 %v214
    %v398 = vunpack.c.l.b16 %v215
    %v399 = vunpack.c.h.b16 %v215
    %v400 = vunpack.c.l.b16 %v216
    %v401 = vunpack.c.h.b16 %v216
    %v402 = vunpack.c.l.b16 %v217
    %v403 = vunpack.c.h.b16 %v217
    %v404 = vunpack.c.l.b16 %v218
    %v405 = vunpack.c.h.b16 %v218
    %v406 = vunpack.c.l.b16 %v219
    %v407 = vunpack.c.h.b16 %v219
    %v408 = vunpack.c.l.b16 %v220
    %v409 = vunpack.c.h.b16 %v220
    %v410 = vunpack.c.l.b16 %v221
    %v411 = vunpack.c.h.b16 %v221
    %v412 = vunpack.c.l.b16 %v222
    %v413 = vunpack.c.h.b16 %v222
    %v414 = vunpack.c.l.b16 %v223
    %v415 = vunpack.c.h.b16 %v223
    %v416 = vunpack.c.l.b16 %v224
    %v417 = vunpack.c.h.b16 %v224
    %v418 = vunpack.c.l.b16 %v225
    %v419 = vunpack.c.h.b16 %v225
    %v420 = vunpack.c.l.b16 %v226
    %v421 = vunpack.c.h.b16 %v226
    %v422 = vunpack.c.l.b16 %v227
    %v423 = vunpack.c.h.b16 %v227
    %v424 = vunpack.c.l.b16 %v228
    %v425 = vunpack.c.h.b16 %v228
    %v426 = vunpack.c.l.b16 %v229
    %v427 = vunpack.c.h.b16 %v229
    %v428 = vunpack.c.l.b16 %v230
    %v429 = vunpack.c.h.b16 %v230
    %v430 = vunpack.c.l.b16 %v231
    %v431 = vunpack.c.h.b16 %v231
    %v432 = vunpack.c.l.b16 %v232
    %v433 = vunpack.c.h.b16 %v232
    %v434 = vunpack.c.l.b16 %v233
    %v435 = vunpack.c.h.b16 %v233
    %v436 = vunpack.c.l.b16 %v234
    %v437 = vunpack.c.h.b16 %v234
    %v438 = vunpack.c.l.b16 %v235
    %v439 = vunpack.c.h.b16 %v235
    %v440 = vunpack.c.l.b16 %v236
    %v441 = vunpack.c.h.b16 %v236
    %v442 = vunpack.c.l.b16 %v237
    %v443 = vunpack.c.h.b16 %v237
    %v444 = vunpack.c.l.b16 %v238
    %v445 = vunpack.c.h.b16 %v238
    %v446 = vunpack.c.l.b16 %v239
    %v447 = vunpack.c.h.b16 %v239
    %v448 = vunpack.c.l.b16 %v240
    %v449 = vunpack.c.h.b16 %v240
    %v450 = vunpack.c.l.b16 %v241
    %v451 = vunpack.c.h.b16 %v241
    %v452 = vunpack.c.l.b16 %v242
    %v453 = vunpack.c.h.b16 %v242
    %v454 = vunpack.c.l.b16 %v243
    %v455 = vunpack.c.h.b16 %v243
    %v456 = vunpack.c.l.b16 %v244
    %v457 = vunpack.c.h.b16 %v244
    %v458 = vunpack.c.l.b16 %v245
    %v459 = vunpack.c.h.b16 %v245
    %v460 = vpack.c.b16 %v336, %v332
    %v461 = vpack.c.b16 %v337, %v333
    %v462 = vpack.c.b16 %v338, %v334
    %v463 = vpack.c.b16 %v339, %v335
    %v464 = vpack.c.b16 %v344, %v340
    %v465 = vpack.c.b16 %v345, %v341
    %v466 = vpack.c.b16 %v346, %v342
    %v467 = vpack.c.b16 %v347, %v343
    %v468 = vpack.c.b16 %v352, %v348
    %v469 = vpack.c.b16 %v353, %v349
    %v470 = vpack.c.b16 %v354, %v350
    %v471 = vpack.c.b16 %v355, %v351
    %v472 = vpack.c.b16 %v360, %v356
    %v473 = vpack.c.b16 %v361, %v357
    %v474 = vpack.c.b16 %v362, %v358
    %v475 = vpack.c.b16 %v363, %v359
    %v476 = vpack.c.b16 %v368, %v364
    %v477 = vpack.c.b16 %v369, %v365
    %v478 = vpack.c.b16 %v370, %v366
    %v479 = vpack.c.b16 %v371, %v367
    %v480 = vpack.c.b16 %v376, %v372
    %v481 = vpack.c.b16 %v377, %v373
    %v482 = vpack.c.b16 %v378, %v374
    %v483 = vpack.c.b16 %v379, %v375
    %v484 = vpack.c.b16 %v384, %v380
    %v485 = vpack.c.b16 %v385, %v381
    %v486 = vpack.c.b16 %v386, %v382
    %v487 = vpack.c.b16 %v387, %v383
    %v488 = vpack.c.b16 %v392, %v388
    %v489 = vpack.c.b16 %v393, %v389
    %v490 = vpack.c.b16 %v394, %v390
    %v491 = vpack.c.b16 %v395, %v391
    %v492 = vpack.c.b16 %v400, %v396
    %v493 = vpack.c.b16 %v401, %v397
    %v494 = vpack.c.b16 %v402, %v398
    %v495 = vpack.c.b16 %v403, %v399
    %v496 = vpack.c.b16 %v408, %v404
    %v497 = vpack.c.b16 %v409, %v405
    %v498 = vpack.c.b16 %v410, %v406
    %v499 = vpack.c.b16 %v411, %v407
    %v500 = vpack.c.b16 %v416, %v412
    %v501 = vpack.c.b16 %v417, %v413
    %v502 = vpack.c.b16 %v418, %v414
    %v503 = vpack.c.b16 %v419, %v415
    %v504 = vpack.c.b16 %v424, %v420
    %v505 = vpack.c.b16 %v425, %v421
    %v506 = vpack.c.b16 %v426, %v422
    %v507 = vpack.c.b16 %v427, %v423
    %v508 = vpack.c.b16 %v432, %v428
    %v509 = vpack.c.b16 %v433, %v429
    %v510 = vpack.c.b16 %v434, %v430
    %v511 = vpack.c.b16 %v435, %v431
    %v512 = vpack.c.b16 %v440, %v436
    %v513 = vpack.c.b16 %v441, %v437
    %v514 = vpack.c.b16 %v442, %v438
    %v515 = vpack.c.b16 %v443, %v439
    %v516 = vpack.c.b16 %v448, %v444
    %v517 = vpack.c.b16 %v449, %v445
    %v518 = vpack.c.b16 %v450, %v446
    %v519 = vpack.c.b16 %v451, %v447
    %v520 = vpack.c.b16 %v456, %v452
    %v521 = vpack.c.b16 %v457, %v453
    %v522 = vpack.c.b16 %v458, %v454
    %v523 = vpack.c.b16 %v459, %v455
    %588 = vmatprep.subr.bf16.mxu0 %v461
    %589 = vmatpush1.bf16.msra.mxu0 %v460
    %590 = vmatprep.subr.bf16.mxu0 %v465
    %591 = vmatpush1.bf16.msra.mxu0 %v464
    %592 = vmatprep.subr.bf16.mxu0 %v469
    %593 = vmatpush1.bf16.msra.mxu0 %v468
    %594 = vmatprep.subr.bf16.mxu0 %v473
    %595 = vmatpush1.bf16.msra.mxu0 %v472
    %596 = vmatprep.subr.bf16.mxu0 %v477
    %597 = vmatpush1.bf16.msra.mxu0 %v476
    %598 = vmatprep.subr.bf16.mxu0 %v481
    %599 = vmatpush1.bf16.msra.mxu0 %v480
    %600 = vmatprep.subr.bf16.mxu0 %v485
    %601 = vmatpush1.bf16.msra.mxu0 %v484
    %602 = vmatprep.subr.bf16.mxu0 %v489
    %603 = vmatpush1.bf16.msra.mxu0 %v488
    %604 = vmatprep.subr.bf16.mxu0 %v493
    %605 = vmatpush1.bf16.msra.mxu0 %v492
    %606 = vmatprep.subr.bf16.mxu0 %v497
    %607 = vmatpush1.bf16.msra.mxu0 %v496
    %608 = vmatprep.subr.bf16.mxu0 %v501
    %609 = vmatpush1.bf16.msra.mxu0 %v500
    %610 = vmatprep.subr.bf16.mxu0 %v505
    %611 = vmatpush1.bf16.msra.mxu0 %v504
    %612 = vmatprep.subr.bf16.mxu0 %v509
    %613 = vmatpush1.bf16.msra.mxu0 %v508
    %614 = vmatprep.subr.bf16.mxu0 %v513
    %615 = vmatpush1.bf16.msra.mxu0 %v512
    %616 = vmatprep.subr.bf16.mxu0 %v517
    %617 = vmatpush1.bf16.msra.mxu0 %v516
    %618 = vmatprep.subr.bf16.mxu0 %v521
    %619 = vmatpush1.bf16.msra.mxu0 %v520
    %620 = vmatprep.mubr.bf16.mxu0 %v181
    %621 = vmatmul.mubr.bf16.gmra.mrb[0].mxu0 %v180
    %v622 = vpop.f32.mrb[0].mxu0
    %v623 = vadd.f32 %v251, %v622
    %v624 = vpop.f32.mrb[0].mxu0
    %v625 = vadd.f32 %v255, %v624
    %v626 = vpop.f32.mrb[0].mxu0
    %v627 = vpop.f32.mrb[0].mxu0
    %628 = vdwg.mxu0
    %629 = vmatprep.subr.bf16.mxu0 %v463
    %630 = vmatpush1.bf16.msra.mxu0 %v462
    %631 = vmatprep.subr.bf16.mxu0 %v467
    %632 = vmatpush1.bf16.msra.mxu0 %v466
    %633 = vmatprep.subr.bf16.mxu0 %v471
    %634 = vmatpush1.bf16.msra.mxu0 %v470
    %635 = vmatprep.subr.bf16.mxu0 %v475
    %636 = vmatpush1.bf16.msra.mxu0 %v474
    %637 = vmatprep.subr.bf16.mxu0 %v479
    %638 = vmatpush1.bf16.msra.mxu0 %v478
    %639 = vmatprep.subr.bf16.mxu0 %v483
    %640 = vmatpush1.bf16.msra.mxu0 %v482
    %641 = vmatprep.subr.bf16.mxu0 %v487
    %642 = vmatpush1.bf16.msra.mxu0 %v486
    %643 = vmatprep.subr.bf16.mxu0 %v491
    %644 = vmatpush1.bf16.msra.mxu0 %v490
    %645 = vmatprep.subr.bf16.mxu0 %v495
    %646 = vmatpush1.bf16.msra.mxu0 %v494
    %647 = vmatprep.subr.bf16.mxu0 %v499
    %648 = vmatpush1.bf16.msra.mxu0 %v498
    %649 = vmatprep.subr.bf16.mxu0 %v503
    %650 = vmatpush1.bf16.msra.mxu0 %v502
    %651 = vmatprep.subr.bf16.mxu0 %v507
    %652 = vmatpush1.bf16.msra.mxu0 %v506
    %653 = vmatprep.subr.bf16.mxu0 %v511
    %654 = vmatpush1.bf16.msra.mxu0 %v510
    %655 = vmatprep.subr.bf16.mxu0 %v515
    %656 = vmatpush1.bf16.msra.mxu0 %v514
    %657 = vmatprep.subr.bf16.mxu0 %v519
    %658 = vmatpush1.bf16.msra.mxu0 %v518
    %659 = vmatprep.subr.bf16.mxu0 %v523
    %660 = vmatpush1.bf16.msra.mxu0 %v522
    %661 = vmatprep.mubr.bf16.mxu0 %v181
    %662 = vmatmul.mubr.bf16.gmra.mrb[0].mxu0 %v180
    %v663 = vpop.f32.mrb[0].mxu0
    %v664 = vadd.f32 %v259, %v663
    %v665 = vpop.f32.mrb[0].mxu0
    %v666 = vadd.f32 %v263, %v665
    %v667 = vpop.f32.mrb[0].mxu0
    %v668 = vpop.f32.mrb[0].mxu0
    %669 = vdwg.mxu0
    %v670 = vmax.f32 %v623, 0.0
    %v671 = vmax.f32 %v625, 0.0
    %v672 = vmax.f32 %v664, 0.0
    %v673 = vmax.f32 %v666, 0.0
    %v674 = vpack.c.bf16 %v670, %v670
    %v675 = vpack.c.bf16 %v671, %v671
    %v676 = vpack.c.bf16 %v672, %v672
    %v677 = vpack.c.bf16 %v673, %v673
    %v678 = vld [vmem:[%s5] sm:$0xff]
    %v679 = vld [vmem:[%s5 + $0x8] sm:$0xff]
    %v680 = vld [vmem:[%s5 + $0x10] sm:$0xff]
    %v681 = vld [vmem:[%s5 + $0x18] sm:$0xf]
    %v682 = vld [vmem:[%s5 + $0x1c] sm:$0xff]
    %v683 = vld [vmem:[%s5 + $0x24] sm:$0xff]
    %v684 = vld [vmem:[%s5 + $0x2c] sm:$0xff]
    %v685 = vld [vmem:[%s5 + $0x34] sm:$0xf]
    %v686 = vld [vmem:[%s5 + $0x38] sm:$0xff]
    %v687 = vld [vmem:[%s5 + $0x40] sm:$0xff]
    %v688 = vld [vmem:[%s5 + $0x48] sm:$0xff]
    %v689 = vld [vmem:[%s5 + $0x50] sm:$0xf]
    %v690 = vld [vmem:[%s5 + $0x54] sm:$0xff]
    %v691 = vld [vmem:[%s5 + $0x5c] sm:$0xff]
    %v692 = vld [vmem:[%s5 + $0x64] sm:$0xff]
    %v693 = vld [vmem:[%s5 + $0x6c] sm:$0xf]
    %v694 = vld [vmem:[%s5 + $0x70] sm:$0xff]
    %v695 = vld [vmem:[%s5 + $0x78] sm:$0xff]
    %v696 = vld [vmem:[%s5 + $0x80] sm:$0xff]
    %v697 = vld [vmem:[%s5 + $0x88] sm:$0xf]
    %v698 = vld [vmem:[%s5 + $0x8c] sm:$0xff]
    %v699 = vld [vmem:[%s5 + $0x94] sm:$0xff]
    %v700 = vld [vmem:[%s5 + $0x9c] sm:$0xff]
    %v701 = vld [vmem:[%s5 + $0xa4] sm:$0xf]
    %v702 = vld [vmem:[%s5 + $0xa8] sm:$0xff]
    %v703 = vld [vmem:[%s5 + $0xb0] sm:$0xff]
    %v704 = vld [vmem:[%s5 + $0xb8] sm:$0xff]
    %v705 = vld [vmem:[%s5 + $0xc0] sm:$0xf]
    %v706 = vld [vmem:[%s5 + $0xc4] sm:$0xff]
    %v707 = vld [vmem:[%s5 + $0xcc] sm:$0xff]
    %v708 = vld [vmem:[%s5 + $0xd4] sm:$0xff]
    %v709 = vld [vmem:[%s5 + $0xdc] sm:$0xf]
    %v710 = vld [vmem:[%s5 + $0xe0] sm:$0xff]
    %v711 = vld [vmem:[%s5 + $0xe8] sm:$0xff]
    %v712 = vld [vmem:[%s5 + $0xf0] sm:$0xff]
    %v713 = vld [vmem:[%s5 + $0xf8] sm:$0xf]
    %v714 = vld [vmem:[%s5 + $0xfc] sm:$0xff]
    %v715 = vld [vmem:[%s5 + $0x104] sm:$0xff]
    %v716 = vld [vmem:[%s5 + $0x10c] sm:$0xff]
    %v717 = vld [vmem:[%s5 + $0x114] sm:$0xf]
    %v718 = vld [vmem:[%s5 + $0x118] sm:$0xff]
    %v719 = vld [vmem:[%s5 + $0x120] sm:$0xff]
    %v720 = vld [vmem:[%s5 + $0x128] sm:$0xff]
    %v721 = vld [vmem:[%s5 + $0x130] sm:$0xf]
    %v722 = vld [vmem:[%s5 + $0x134] sm:$0xff]
    %v723 = vld [vmem:[%s5 + $0x13c] sm:$0xff]
    %v724 = vld [vmem:[%s5 + $0x144] sm:$0xff]
    %v725 = vld [vmem:[%s5 + $0x14c] sm:$0xf]
    %v726 = vld [vmem:[%s5 + $0x150] sm:$0xff]
    %v727 = vld [vmem:[%s5 + $0x158] sm:$0xff]
    %v728 = vld [vmem:[%s5 + $0x160] sm:$0xff]
    %v729 = vld [vmem:[%s5 + $0x168] sm:$0xf]
    %v730 = vld [vmem:[%s5 + $0x16c] sm:$0xff]
    %v731 = vld [vmem:[%s5 + $0x174] sm:$0xff]
    %v732 = vld [vmem:[%s5 + $0x17c] sm:$0xff]
    %v733 = vld [vmem:[%s5 + $0x184] sm:$0xf]
    %v734 = vld [vmem:[%s5 + $0x188] sm:$0xff]
    %v735 = vld [vmem:[%s5 + $0x190] sm:$0xff]
    %v736 = vld [vmem:[%s5 + $0x198] sm:$0xff]
    %v737 = vld [vmem:[%s5 + $0x1a0] sm:$0xf]
    %v738 = vld [vmem:[%s5 + $0x1a4] sm:$0xff]
    %v739 = vld [vmem:[%s5 + $0x1ac] sm:$0xff]
    %v740 = vld [vmem:[%s5 + $0x1b4] sm:$0xff]
    %v741 = vld [vmem:[%s5 + $0x1bc] sm:$0xf]
    %v742 = vld [vmem:[%s5 + $0x1c0] sm:$0xff]
    %v743 = vld [vmem:[%s5 + $0x1c8] sm:$0xff]
    %v744 = vld [vmem:[%s5 + $0x1d0] sm:$0xff]
    %v745 = vld [vmem:[%s5 + $0x1d8] sm:$0xf]
    %v746 = vld [vmem:[%s5 + $0x1dc] sm:$0xff]
    %v747 = vld [vmem:[%s5 + $0x1e4] sm:$0xff]
    %v748 = vld [vmem:[%s5 + $0x1ec] sm:$0xff]
    %v749 = vld [vmem:[%s5 + $0x1f4] sm:$0xf]
    %v750 = vld [vmem:[%s5 + $0x1f8] sm:$0xff]
    %v751 = vld [vmem:[%s5 + $0x200] sm:$0xff]
    %v752 = vld [vmem:[%s5 + $0x208] sm:$0xff]
    %v753 = vld [vmem:[%s5 + $0x210] sm:$0xf]
    %v754 = vld [vmem:[%s5 + $0x214] sm:$0xff]
    %v755 = vld [vmem:[%s5 + $0x21c] sm:$0xff]
    %v756 = vld [vmem:[%s5 + $0x224] sm:$0xff]
    %v757 = vld [vmem:[%s5 + $0x22c] sm:$0xf]
    %v758 = vld [vmem:[%s5 + $0x230] sm:$0xff]
    %v759 = vld [vmem:[%s5 + $0x238] sm:$0xff]
    %v760 = vld [vmem:[%s5 + $0x240] sm:$0xff]
    %v761 = vld [vmem:[%s5 + $0x248] sm:$0xf]
    %v762 = vld [vmem:[%s5 + $0x24c] sm:$0xff]
    %v763 = vld [vmem:[%s5 + $0x254] sm:$0xff]
    %v764 = vld [vmem:[%s5 + $0x25c] sm:$0xff]
    %v765 = vld [vmem:[%s5 + $0x264] sm:$0xf]
    %v766 = vld [vmem:[%s5 + $0x268] sm:$0xff]
    %v767 = vld [vmem:[%s5 + $0x270] sm:$0xff]
    %v768 = vld [vmem:[%s5 + $0x278] sm:$0xff]
    %v769 = vld [vmem:[%s5 + $0x280] sm:$0xf]
    %v770 = vld [vmem:[%s5 + $0x284] sm:$0xff]
    %v771 = vld [vmem:[%s5 + $0x28c] sm:$0xff]
    %v772 = vld [vmem:[%s5 + $0x294] sm:$0xff]
    %v773 = vld [vmem:[%s5 + $0x29c] sm:$0xf]
    %v774 = vld [vmem:[%s5 + $0x2a0] sm:$0xff]
    %v775 = vld [vmem:[%s5 + $0x2a8] sm:$0xff]
    %v776 = vld [vmem:[%s5 + $0x2b0] sm:$0xff]
    %v777 = vld [vmem:[%s5 + $0x2b8] sm:$0xf]
    %v778 = vld [vmem:[%s5 + $0x2bc] sm:$0xff]
    %v779 = vld [vmem:[%s5 + $0x2c4] sm:$0xff]
    %v780 = vld [vmem:[%s5 + $0x2cc] sm:$0xff]
    %v781 = vld [vmem:[%s5 + $0x2d4] sm:$0xf]
    %v782 = vld [vmem:[%s5 + $0x2d8] sm:$0xff]
    %v783 = vld [vmem:[%s5 + $0x2e0] sm:$0xff]
    %v784 = vld [vmem:[%s5 + $0x2e8] sm:$0xff]
    %v785 = vld [vmem:[%s5 + $0x2f0] sm:$0xf]
    %v786 = vld [vmem:[%s5 + $0x2f4] sm:$0xff]
    %v787 = vld [vmem:[%s5 + $0x2fc] sm:$0xff]
    %v788 = vld [vmem:[%s5 + $0x304] sm:$0xff]
    %v789 = vld [vmem:[%s5 + $0x30c] sm:$0xf]
    %v790 = vld [vmem:[%s5 + $0x310] sm:$0xff]
    %v791 = vld [vmem:[%s5 + $0x318] sm:$0xff]
    %v792 = vld [vmem:[%s5 + $0x320] sm:$0xff]
    %v793 = vld [vmem:[%s5 + $0x328] sm:$0xf]
    %v794 = vld [vmem:[%s5 + $0x32c] sm:$0xff]
    %v795 = vld [vmem:[%s5 + $0x334] sm:$0xff]
    %v796 = vld [vmem:[%s5 + $0x33c] sm:$0xff]
    %v797 = vld [vmem:[%s5 + $0x344] sm:$0xf]
    %v798 = vld [vmem:[%s5 + $0x348] sm:$0xff]
    %v799 = vld [vmem:[%s5 + $0x350] sm:$0xff]
    %v800 = vld [vmem:[%s5 + $0x358] sm:$0xff]
    %v801 = vld [vmem:[%s5 + $0x360] sm:$0xf]
    %v802 = vld [vmem:[%s5 + $0x364] sm:$0xff]
    %v803 = vld [vmem:[%s5 + $0x36c] sm:$0xff]
    %v804 = vld [vmem:[%s5 + $0x374] sm:$0xff]
    %v805 = vld [vmem:[%s5 + $0x37c] sm:$0xf]
    %v806 = vld [vmem:[%s5 + $0x380] sm:$0xff]
    %v807 = vld [vmem:[%s5 + $0x388] sm:$0xff]
    %v808 = vld [vmem:[%s5 + $0x390] sm:$0xff]
    %v809 = vld [vmem:[%s5 + $0x398] sm:$0xf]
    %v810 = vld [vmem:[%s5 + $0x39c] sm:$0xff]
    %v811 = vld [vmem:[%s5 + $0x3a4] sm:$0xff]
    %v812 = vld [vmem:[%s5 + $0x3ac] sm:$0xff]
    %v813 = vld [vmem:[%s5 + $0x3b4] sm:$0xf]
    %v814 = vld [vmem:[%s5 + $0x3b8] sm:$0xff]
    %v815 = vld [vmem:[%s5 + $0x3c0] sm:$0xff]
    %v816 = vld [vmem:[%s5 + $0x3c8] sm:$0xff]
    %v817 = vld [vmem:[%s5 + $0x3d0] sm:$0xf]
    %v818 = vld [vmem:[%s5 + $0x3d4] sm:$0xff]
    %v819 = vld [vmem:[%s5 + $0x3dc] sm:$0xff]
    %v820 = vld [vmem:[%s5 + $0x3e4] sm:$0xff]
    %v821 = vld [vmem:[%s5 + $0x3ec] sm:$0xf]
    %v822 = vld [vmem:[%s5 + $0x3f0] sm:$0xff]
    %v823 = vld [vmem:[%s5 + $0x3f8] sm:$0xff]
    %v824 = vld [vmem:[%s5 + $0x400] sm:$0xff]
    %v825 = vld [vmem:[%s5 + $0x408] sm:$0xf]
    %v826 = vld [vmem:[%s5 + $0x40c] sm:$0xff]
    %v827 = vld [vmem:[%s5 + $0x414] sm:$0xff]
    %v828 = vld [vmem:[%s5 + $0x41c] sm:$0xff]
    %v829 = vld [vmem:[%s5 + $0x424] sm:$0xf]
    %v830 = vld [vmem:[%s5 + $0x428] sm:$0xff]
    %v831 = vld [vmem:[%s5 + $0x430] sm:$0xff]
    %v832 = vld [vmem:[%s5 + $0x438] sm:$0xff]
    %v833 = vld [vmem:[%s5 + $0x440] sm:$0xf]
    %v834 = vld [vmem:[%s5 + $0x444] sm:$0xff]
    %v835 = vld [vmem:[%s5 + $0x44c] sm:$0xff]
    %v836 = vld [vmem:[%s5 + $0x454] sm:$0xff]
    %v837 = vld [vmem:[%s5 + $0x45c] sm:$0xf]
    %v838 = vld [vmem:[%s5 + $0x460] sm:$0xff]
    %v839 = vld [vmem:[%s5 + $0x468] sm:$0xff]
    %v840 = vld [vmem:[%s5 + $0x470] sm:$0xff]
    %v841 = vld [vmem:[%s5 + $0x478] sm:$0xf]
    %v842 = vld [vmem:[%s5 + $0x47c] sm:$0xff]
    %v843 = vld [vmem:[%s5 + $0x484] sm:$0xff]
    %v844 = vld [vmem:[%s5 + $0x48c] sm:$0xff]
    %v845 = vld [vmem:[%s5 + $0x494] sm:$0xf]
    %v846 = vld [vmem:[%s5 + $0x498] sm:$0xff]
    %v847 = vld [vmem:[%s5 + $0x4a0] sm:$0xff]
    %v848 = vld [vmem:[%s5 + $0x4a8] sm:$0xff]
    %v849 = vld [vmem:[%s5 + $0x4b0] sm:$0xf]
    %v850 = vld [vmem:[%s5 + $0x4b4] sm:$0xff]
    %v851 = vld [vmem:[%s5 + $0x4bc] sm:$0xff]
    %v852 = vld [vmem:[%s5 + $0x4c4] sm:$0xff]
    %v853 = vld [vmem:[%s5 + $0x4cc] sm:$0xf]
    %v854 = vld [vmem:[%s5 + $0x4d0] sm:$0xff]
    %v855 = vld [vmem:[%s5 + $0x4d8] sm:$0xff]
    %v856 = vld [vmem:[%s5 + $0x4e0] sm:$0xff]
    %v857 = vld [vmem:[%s5 + $0x4e8] sm:$0xf]
    %v858 = vld [vmem:[%s5 + $0x4ec] sm:$0xff]
    %v859 = vld [vmem:[%s5 + $0x4f4] sm:$0xff]
    %v860 = vld [vmem:[%s5 + $0x4fc] sm:$0xff]
    %v861 = vld [vmem:[%s5 + $0x504] sm:$0xf]
    %v862 = vld [vmem:[%s5 + $0x508] sm:$0xff]
    %v863 = vld [vmem:[%s5 + $0x510] sm:$0xff]
    %v864 = vld [vmem:[%s5 + $0x518] sm:$0xff]
    %v865 = vld [vmem:[%s5 + $0x520] sm:$0xf]
    %v866 = vld [vmem:[%s5 + $0x524] sm:$0xff]
    %v867 = vld [vmem:[%s5 + $0x52c] sm:$0xff]
    %v868 = vld [vmem:[%s5 + $0x534] sm:$0xff]
    %v869 = vld [vmem:[%s5 + $0x53c] sm:$0xf]
    %v870 = vld [vmem:[%s5 + $0x540] sm:$0xff]
    %v871 = vld [vmem:[%s5 + $0x548] sm:$0xff]
    %v872 = vld [vmem:[%s5 + $0x550] sm:$0xff]
    %v873 = vld [vmem:[%s5 + $0x558] sm:$0xf]
    %v874 = vld [vmem:[%s5 + $0x55c] sm:$0xff]
    %v875 = vld [vmem:[%s5 + $0x564] sm:$0xff]
    %v876 = vld [vmem:[%s5 + $0x56c] sm:$0xff]
    %v877 = vld [vmem:[%s5 + $0x574] sm:$0xf]
    %v878 = vld [vmem:[%s5 + $0x578] sm:$0xff]
    %v879 = vld [vmem:[%s5 + $0x580] sm:$0xff]
    %v880 = vld [vmem:[%s5 + $0x588] sm:$0xff]
    %v881 = vld [vmem:[%s5 + $0x590] sm:$0xf]
    %v882 = vld [vmem:[%s5 + $0x594] sm:$0xff]
    %v883 = vld [vmem:[%s5 + $0x59c] sm:$0xff]
    %v884 = vld [vmem:[%s5 + $0x5a4] sm:$0xff]
    %v885 = vld [vmem:[%s5 + $0x5ac] sm:$0xf]
    %v886 = vld [vmem:[%s5 + $0x5b0] sm:$0xff]
    %v887 = vld [vmem:[%s5 + $0x5b8] sm:$0xff]
    %v888 = vld [vmem:[%s5 + $0x5c0] sm:$0xff]
    %v889 = vld [vmem:[%s5 + $0x5c8] sm:$0xf]
    %v890 = vld [vmem:[%s5 + $0x5cc] sm:$0xff]
    %v891 = vld [vmem:[%s5 + $0x5d4] sm:$0xff]
    %v892 = vld [vmem:[%s5 + $0x5dc] sm:$0xff]
    %v893 = vld [vmem:[%s5 + $0x5e4] sm:$0xf]
    %v894 = vld [vmem:[%s5 + $0x5e8] sm:$0xff]
    %v895 = vld [vmem:[%s5 + $0x5f0] sm:$0xff]
    %v896 = vld [vmem:[%s5 + $0x5f8] sm:$0xff]
    %v897 = vld [vmem:[%s5 + $0x600] sm:$0xf]
    %v898 = vld [vmem:[%s5 + $0x604] sm:$0xff]
    %v899 = vld [vmem:[%s5 + $0x60c] sm:$0xff]
    %v900 = vld [vmem:[%s5 + $0x614] sm:$0xff]
    %v901 = vld [vmem:[%s5 + $0x61c] sm:$0xf]
    %v902 = vld [vmem:[%s5 + $0x620] sm:$0xff]
    %v903 = vld [vmem:[%s5 + $0x628] sm:$0xff]
    %v904 = vld [vmem:[%s5 + $0x630] sm:$0xff]
    %v905 = vld [vmem:[%s5 + $0x638] sm:$0xf]
    %v906 = vld [vmem:[%s5 + $0x63c] sm:$0xff]
    %v907 = vld [vmem:[%s5 + $0x644] sm:$0xff]
    %v908 = vld [vmem:[%s5 + $0x64c] sm:$0xff]
    %v909 = vld [vmem:[%s5 + $0x654] sm:$0xf]
    %v910 = vld [vmem:[%s5 + $0x658] sm:$0xff]
    %v911 = vld [vmem:[%s5 + $0x660] sm:$0xff]
    %v912 = vld [vmem:[%s5 + $0x668] sm:$0xff]
    %v913 = vld [vmem:[%s5 + $0x670] sm:$0xf]
    %v914 = vld [vmem:[%s5 + $0x674] sm:$0xff]
    %v915 = vld [vmem:[%s5 + $0x67c] sm:$0xff]
    %v916 = vld [vmem:[%s5 + $0x684] sm:$0xff]
    %v917 = vld [vmem:[%s5 + $0x68c] sm:$0xf]
    %v918 = vld [vmem:[%s5 + $0x690] sm:$0xff]
    %v919 = vld [vmem:[%s5 + $0x698] sm:$0xff]
    %v920 = vld [vmem:[%s5 + $0x6a0] sm:$0xff]
    %v921 = vld [vmem:[%s5 + $0x6a8] sm:$0xf]
    %v922 = vld [vmem:[%s5 + $0x6ac] sm:$0xff]
    %v923 = vld [vmem:[%s5 + $0x6b4] sm:$0xff]
    %v924 = vld [vmem:[%s5 + $0x6bc] sm:$0xff]
    %v925 = vld [vmem:[%s5 + $0x6c4] sm:$0xf]
    %v926 = vld [vmem:[%s5 + $0x6c8] sm:$0xff]
    %v927 = vld [vmem:[%s5 + $0x6d0] sm:$0xff]
    %v928 = vld [vmem:[%s5 + $0x6d8] sm:$0xff]
    %v929 = vld [vmem:[%s5 + $0x6e0] sm:$0xf]
    %v930 = vld [vmem:[%s5 + $0x6e4] sm:$0xff]
    %v931 = vld [vmem:[%s5 + $0x6ec] sm:$0xff]
    %v932 = vld [vmem:[%s5 + $0x6f4] sm:$0xff]
    %v933 = vld [vmem:[%s5 + $0x6fc] sm:$0xf]
    %v934 = vld [vmem:[%s6] sm:$0xff]
    %v936 = vlaneseq
    %v937 = vshrl.u32 %v936, 7
    %v938 = vsub.s32 0, %v937
    %v939 = vrot.slane %v934, %v938
    %v940 = vlaneseq
    %v941 = vshrl.u32 %v940, 7
    %v942 = vsub.s32 1, %v941
    %v943 = vrot.slane %v934, %v942
    %v944 = vlaneseq
    %v945 = vshrl.u32 %v944, 7
    %v946 = vsub.s32 2, %v945
    %v947 = vrot.slane %v934, %v946
    %v948 = vlaneseq
    %v949 = vshrl.u32 %v948, 7
    %v950 = vsub.s32 3, %v949
    %v951 = vrot.slane %v934, %v950
    %v952 = vlaneseq
    %v953 = vshrl.u32 %v952, 7
    %v954 = vsub.s32 4, %v953
    %v955 = vrot.slane %v934, %v954
    %v956 = vlaneseq
    %v957 = vshrl.u32 %v956, 7
    %v958 = vsub.s32 5, %v957
    %v959 = vrot.slane %v934, %v958
    %v960 = vlaneseq
    %v961 = vshrl.u32 %v960, 7
    %v962 = vsub.s32 6, %v961
    %v963 = vrot.slane %v934, %v962
    %v1227 = vunpack.c.l.b16 %v678
    %v1228 = vunpack.c.h.b16 %v678
    %v1229 = vunpack.c.l.b16 %v679
    %v1230 = vunpack.c.h.b16 %v679
    %v1231 = vunpack.c.l.b16 %v680
    %v1232 = vunpack.c.h.b16 %v680
    %v1233 = vunpack.c.l.b16 %v681
    %v1234 = vunpack.c.l.b16 %v682
    %v1235 = vunpack.c.h.b16 %v682
    %v1236 = vunpack.c.l.b16 %v683
    %v1237 = vunpack.c.h.b16 %v683
    %v1238 = vunpack.c.l.b16 %v684
    %v1239 = vunpack.c.h.b16 %v684
    %v1240 = vunpack.c.l.b16 %v685
    %v1241 = vunpack.c.l.b16 %v686
    %v1242 = vunpack.c.h.b16 %v686
    %v1243 = vunpack.c.l.b16 %v687
    %v1244 = vunpack.c.h.b16 %v687
    %v1245 = vunpack.c.l.b16 %v688
    %v1246 = vunpack.c.h.b16 %v688
    %v1247 = vunpack.c.l.b16 %v689
    %v1248 = vunpack.c.l.b16 %v690
    %v1249 = vunpack.c.h.b16 %v690
    %v1250 = vunpack.c.l.b16 %v691
    %v1251 = vunpack.c.h.b16 %v691
    %v1252 = vunpack.c.l.b16 %v692
    %v1253 = vunpack.c.h.b16 %v692
    %v1254 = vunpack.c.l.b16 %v693
    %v1255 = vunpack.c.l.b16 %v694
    %v1256 = vunpack.c.h.b16 %v694
    %v1257 = vunpack.c.l.b16 %v695
    %v1258 = vunpack.c.h.b16 %v695
    %v1259 = vunpack.c.l.b16 %v696
    %v1260 = vunpack.c.h.b16 %v696
    %v1261 = vunpack.c.l.b16 %v697
    %v1262 = vunpack.c.l.b16 %v698
    %v1263 = vunpack.c.h.b16 %v698
    %v1264 = vunpack.c.l.b16 %v699
    %v1265 = vunpack.c.h.b16 %v699
    %v1266 = vunpack.c.l.b16 %v700
    %v1267 = vunpack.c.h.b16 %v700
    %v1268 = vunpack.c.l.b16 %v701
    %v1269 = vunpack.c.l.b16 %v702
    %v1270 = vunpack.c.h.b16 %v702
    %v1271 = vunpack.c.l.b16 %v703
    %v1272 = vunpack.c.h.b16 %v703
    %v1273 = vunpack.c.l.b16 %v704
    %v1274 = vunpack.c.h.b16 %v704
    %v1275 = vunpack.c.l.b16 %v705
    %v1276 = vunpack.c.l.b16 %v706
    %v1277 = vunpack.c.h.b16 %v706
    %v1278 = vunpack.c.l.b16 %v707
    %v1279 = vunpack.c.h.b16 %v707
    %v1280 = vunpack.c.l.b16 %v708
    %v1281 = vunpack.c.h.b16 %v708
    %v1282 = vunpack.c.l.b16 %v709
    %v1283 = vunpack.c.l.b16 %v710
    %v1284 = vunpack.c.h.b16 %v710
    %v1285 = vunpack.c.l.b16 %v711
    %v1286 = vunpack.c.h.b16 %v711
    %v1287 = vunpack.c.l.b16 %v712
    %v1288 = vunpack.c.h.b16 %v712
    %v1289 = vunpack.c.l.b16 %v713
    %v1290 = vunpack.c.l.b16 %v714
    %v1291 = vunpack.c.h.b16 %v714
    %v1292 = vunpack.c.l.b16 %v715
    %v1293 = vunpack.c.h.b16 %v715
    %v1294 = vunpack.c.l.b16 %v716
    %v1295 = vunpack.c.h.b16 %v716
    %v1296 = vunpack.c.l.b16 %v717
    %v1297 = vunpack.c.l.b16 %v718
    %v1298 = vunpack.c.h.b16 %v718
    %v1299 = vunpack.c.l.b16 %v719
    %v1300 = vunpack.c.h.b16 %v719
    %v1301 = vunpack.c.l.b16 %v720
    %v1302 = vunpack.c.h.b16 %v720
    %v1303 = vunpack.c.l.b16 %v721
    %v1304 = vunpack.c.l.b16 %v722
    %v1305 = vunpack.c.h.b16 %v722
    %v1306 = vunpack.c.l.b16 %v723
    %v1307 = vunpack.c.h.b16 %v723
    %v1308 = vunpack.c.l.b16 %v724
    %v1309 = vunpack.c.h.b16 %v724
    %v1310 = vunpack.c.l.b16 %v725
    %v1311 = vunpack.c.l.b16 %v726
    %v1312 = vunpack.c.h.b16 %v726
    %v1313 = vunpack.c.l.b16 %v727
    %v1314 = vunpack.c.h.b16 %v727
    %v1315 = vunpack.c.l.b16 %v728
    %v1316 = vunpack.c.h.b16 %v728
    %v1317 = vunpack.c.l.b16 %v729
    %v1318 = vunpack.c.l.b16 %v730
    %v1319 = vunpack.c.h.b16 %v730
    %v1320 = vunpack.c.l.b16 %v731
    %v1321 = vunpack.c.h.b16 %v731
    %v1322 = vunpack.c.l.b16 %v732
    %v1323 = vunpack.c.h.b16 %v732
    %v1324 = vunpack.c.l.b16 %v733
    %v1325 = vunpack.c.l.b16 %v734
    %v1326 = vunpack.c.h.b16 %v734
    %v1327 = vunpack.c.l.b16 %v735
    %v1328 = vunpack.c.h.b16 %v735
    %v1329 = vunpack.c.l.b16 %v736
    %v1330 = vunpack.c.h.b16 %v736
    %v1331 = vunpack.c.l.b16 %v737
    %v1332 = vunpack.c.l.b16 %v738
    %v1333 = vunpack.c.h.b16 %v738
    %v1334 = vunpack.c.l.b16 %v739
    %v1335 = vunpack.c.h.b16 %v739
    %v1336 = vunpack.c.l.b16 %v740
    %v1337 = vunpack.c.h.b16 %v740
    %v1338 = vunpack.c.l.b16 %v741
    %v1339 = vunpack.c.l.b16 %v742
    %v1340 = vunpack.c.h.b16 %v742
    %v1341 = vunpack.c.l.b16 %v743
    %v1342 = vunpack.c.h.b16 %v743
    %v1343 = vunpack.c.l.b16 %v744
    %v1344 = vunpack.c.h.b16 %v744
    %v1345 = vunpack.c.l.b16 %v745
    %v1346 = vunpack.c.l.b16 %v746
    %v1347 = vunpack.c.h.b16 %v746
    %v1348 = vunpack.c.l.b16 %v747
    %v1349 = vunpack.c.h.b16 %v747
    %v1350 = vunpack.c.l.b16 %v748
    %v1351 = vunpack.c.h.b16 %v748
    %v1352 = vunpack.c.l.b16 %v749
    %v1353 = vunpack.c.l.b16 %v750
    %v1354 = vunpack.c.h.b16 %v750
    %v1355 = vunpack.c.l.b16 %v751
    %v1356 = vunpack.c.h.b16 %v751
    %v1357 = vunpack.c.l.b16 %v752
    %v1358 = vunpack.c.h.b16 %v752
    %v1359 = vunpack.c.l.b16 %v753
    %v1360 = vunpack.c.l.b16 %v754
    %v1361 = vunpack.c.h.b16 %v754
    %v1362 = vunpack.c.l.b16 %v755
    %v1363 = vunpack.c.h.b16 %v755
    %v1364 = vunpack.c.l.b16 %v756
    %v1365 = vunpack.c.h.b16 %v756
    %v1366 = vunpack.c.l.b16 %v757
    %v1367 = vunpack.c.l.b16 %v758
    %v1368 = vunpack.c.h.b16 %v758
    %v1369 = vunpack.c.l.b16 %v759
    %v1370 = vunpack.c.h.b16 %v759
    %v1371 = vunpack.c.l.b16 %v760
    %v1372 = vunpack.c.h.b16 %v760
    %v1373 = vunpack.c.l.b16 %v761
    %v1374 = vunpack.c.l.b16 %v762
    %v1375 = vunpack.c.h.b16 %v762
    %v1376 = vunpack.c.l.b16 %v763
    %v1377 = vunpack.c.h.b16 %v763
    %v1378 = vunpack.c.l.b16 %v764
    %v1379 = vunpack.c.h.b16 %v764
    %v1380 = vunpack.c.l.b16 %v765
    %v1381 = vunpack.c.l.b16 %v766
    %v1382 = vunpack.c.h.b16 %v766
    %v1383 = vunpack.c.l.b16 %v767
    %v1384 = vunpack.c.h.b16 %v767
    %v1385 = vunpack.c.l.b16 %v768
    %v1386 = vunpack.c.h.b16 %v768
    %v1387 = vunpack.c.l.b16 %v769
    %v1388 = vunpack.c.l.b16 %v770
    %v1389 = vunpack.c.h.b16 %v770
    %v1390 = vunpack.c.l.b16 %v771
    %v1391 = vunpack.c.h.b16 %v771
    %v1392 = vunpack.c.l.b16 %v772
    %v1393 = vunpack.c.h.b16 %v772
    %v1394 = vunpack.c.l.b16 %v773
    %v1395 = vunpack.c.l.b16 %v774
    %v1396 = vunpack.c.h.b16 %v774
    %v1397 = vunpack.c.l.b16 %v775
    %v1398 = vunpack.c.h.b16 %v775
    %v1399 = vunpack.c.l.b16 %v776
    %v1400 = vunpack.c.h.b16 %v776
    %v1401 = vunpack.c.l.b16 %v777
    %v1402 = vunpack.c.l.b16 %v778
    %v1403 = vunpack.c.h.b16 %v778
    %v1404 = vunpack.c.l.b16 %v779
    %v1405 = vunpack.c.h.b16 %v779
    %v1406 = vunpack.c.l.b16 %v780
    %v1407 = vunpack.c.h.b16 %v780
    %v1408 = vunpack.c.l.b16 %v781
    %v1409 = vunpack.c.l.b16 %v782
    %v1410 = vunpack.c.h.b16 %v782
    %v1411 = vunpack.c.l.b16 %v783
    %v1412 = vunpack.c.h.b16 %v783
    %v1413 = vunpack.c.l.b16 %v784
    %v1414 = vunpack.c.h.b16 %v784
    %v1415 = vunpack.c.l.b16 %v785
    %v1416 = vunpack.c.l.b16 %v786
    %v1417 = vunpack.c.h.b16 %v786
    %v1418 = vunpack.c.l.b16 %v787
    %v1419 = vunpack.c.h.b16 %v787
    %v1420 = vunpack.c.l.b16 %v788
    %v1421 = vunpack.c.h.b16 %v788
    %v1422 = vunpack.c.l.b16 %v789
    %v1423 = vunpack.c.l.b16 %v790
    %v1424 = vunpack.c.h.b16 %v790
    %v1425 = vunpack.c.l.b16 %v791
    %v1426 = vunpack.c.h.b16 %v791
    %v1427 = vunpack.c.l.b16 %v792
    %v1428 = vunpack.c.h.b16 %v792
    %v1429 = vunpack.c.l.b16 %v793
    %v1430 = vunpack.c.l.b16 %v794
    %v1431 = vunpack.c.h.b16 %v794
    %v1432 = vunpack.c.l.b16 %v795
    %v1433 = vunpack.c.h.b16 %v795
    %v1434 = vunpack.c.l.b16 %v796
    %v1435 = vunpack.c.h.b16 %v796
    %v1436 = vunpack.c.l.b16 %v797
    %v1437 = vunpack.c.l.b16 %v798
    %v1438 = vunpack.c.h.b16 %v798
    %v1439 = vunpack.c.l.b16 %v799
    %v1440 = vunpack.c.h.b16 %v799
    %v1441 = vunpack.c.l.b16 %v800
    %v1442 = vunpack.c.h.b16 %v800
    %v1443 = vunpack.c.l.b16 %v801
    %v1444 = vunpack.c.l.b16 %v802
    %v1445 = vunpack.c.h.b16 %v802
    %v1446 = vunpack.c.l.b16 %v803
    %v1447 = vunpack.c.h.b16 %v803
    %v1448 = vunpack.c.l.b16 %v804
    %v1449 = vunpack.c.h.b16 %v804
    %v1450 = vunpack.c.l.b16 %v805
    %v1451 = vunpack.c.l.b16 %v806
    %v1452 = vunpack.c.h.b16 %v806
    %v1453 = vunpack.c.l.b16 %v807
    %v1454 = vunpack.c.h.b16 %v807
    %v1455 = vunpack.c.l.b16 %v808
    %v1456 = vunpack.c.h.b16 %v808
    %v1457 = vunpack.c.l.b16 %v809
    %v1458 = vunpack.c.l.b16 %v810
    %v1459 = vunpack.c.h.b16 %v810
    %v1460 = vunpack.c.l.b16 %v811
    %v1461 = vunpack.c.h.b16 %v811
    %v1462 = vunpack.c.l.b16 %v812
    %v1463 = vunpack.c.h.b16 %v812
    %v1464 = vunpack.c.l.b16 %v813
    %v1465 = vunpack.c.l.b16 %v814
    %v1466 = vunpack.c.h.b16 %v814
    %v1467 = vunpack.c.l.b16 %v815
    %v1468 = vunpack.c.h.b16 %v815
    %v1469 = vunpack.c.l.b16 %v816
    %v1470 = vunpack.c.h.b16 %v816
    %v1471 = vunpack.c.l.b16 %v817
    %v1472 = vunpack.c.l.b16 %v818
    %v1473 = vunpack.c.h.b16 %v818
    %v1474 = vunpack.c.l.b16 %v819
    %v1475 = vunpack.c.h.b16 %v819
    %v1476 = vunpack.c.l.b16 %v820
    %v1477 = vunpack.c.h.b16 %v820
    %v1478 = vunpack.c.l.b16 %v821
    %v1479 = vunpack.c.l.b16 %v822
    %v1480 = vunpack.c.h.b16 %v822
    %v1481 = vunpack.c.l.b16 %v823
    %v1482 = vunpack.c.h.b16 %v823
    %v1483 = vunpack.c.l.b16 %v824
    %v1484 = vunpack.c.h.b16 %v824
    %v1485 = vunpack.c.l.b16 %v825
    %v1486 = vunpack.c.l.b16 %v826
    %v1487 = vunpack.c.h.b16 %v826
    %v1488 = vunpack.c.l.b16 %v827
    %v1489 = vunpack.c.h.b16 %v827
    %v1490 = vunpack.c.l.b16 %v828
    %v1491 = vunpack.c.h.b16 %v828
    %v1492 = vunpack.c.l.b16 %v829
    %v1493 = vunpack.c.l.b16 %v830
    %v1494 = vunpack.c.h.b16 %v830
    %v1495 = vunpack.c.l.b16 %v831
    %v1496 = vunpack.c.h.b16 %v831
    %v1497 = vunpack.c.l.b16 %v832
    %v1498 = vunpack.c.h.b16 %v832
    %v1499 = vunpack.c.l.b16 %v833
    %v1500 = vunpack.c.l.b16 %v834
    %v1501 = vunpack.c.h.b16 %v834
    %v1502 = vunpack.c.l.b16 %v835
    %v1503 = vunpack.c.h.b16 %v835
    %v1504 = vunpack.c.l.b16 %v836
    %v1505 = vunpack.c.h.b16 %v836
    %v1506 = vunpack.c.l.b16 %v837
    %v1507 = vunpack.c.l.b16 %v838
    %v1508 = vunpack.c.h.b16 %v838
    %v1509 = vunpack.c.l.b16 %v839
    %v1510 = vunpack.c.h.b16 %v839
    %v1511 = vunpack.c.l.b16 %v840
    %v1512 = vunpack.c.h.b16 %v840
    %v1513 = vunpack.c.l.b16 %v841
    %v1514 = vunpack.c.l.b16 %v842
    %v1515 = vunpack.c.h.b16 %v842
    %v1516 = vunpack.c.l.b16 %v843
    %v1517 = vunpack.c.h.b16 %v843
    %v1518 = vunpack.c.l.b16 %v844
    %v1519 = vunpack.c.h.b16 %v844
    %v1520 = vunpack.c.l.b16 %v845
    %v1521 = vunpack.c.l.b16 %v846
    %v1522 = vunpack.c.h.b16 %v846
    %v1523 = vunpack.c.l.b16 %v847
    %v1524 = vunpack.c.h.b16 %v847
    %v1525 = vunpack.c.l.b16 %v848
    %v1526 = vunpack.c.h.b16 %v848
    %v1527 = vunpack.c.l.b16 %v849
    %v1528 = vunpack.c.l.b16 %v850
    %v1529 = vunpack.c.h.b16 %v850
    %v1530 = vunpack.c.l.b16 %v851
    %v1531 = vunpack.c.h.b16 %v851
    %v1532 = vunpack.c.l.b16 %v852
    %v1533 = vunpack.c.h.b16 %v852
    %v1534 = vunpack.c.l.b16 %v853
    %v1535 = vunpack.c.l.b16 %v854
    %v1536 = vunpack.c.h.b16 %v854
    %v1537 = vunpack.c.l.b16 %v855
    %v1538 = vunpack.c.h.b16 %v855
    %v1539 = vunpack.c.l.b16 %v856
    %v1540 = vunpack.c.h.b16 %v856
    %v1541 = vunpack.c.l.b16 %v857
    %v1542 = vunpack.c.l.b16 %v858
    %v1543 = vunpack.c.h.b16 %v858
    %v1544 = vunpack.c.l.b16 %v859
    %v1545 = vunpack.c.h.b16 %v859
    %v1546 = vunpack.c.l.b16 %v860
    %v1547 = vunpack.c.h.b16 %v860
    %v1548 = vunpack.c.l.b16 %v861
    %v1549 = vunpack.c.l.b16 %v862
    %v1550 = vunpack.c.h.b16 %v862
    %v1551 = vunpack.c.l.b16 %v863
    %v1552 = vunpack.c.h.b16 %v863
    %v1553 = vunpack.c.l.b16 %v864
    %v1554 = vunpack.c.h.b16 %v864
    %v1555 = vunpack.c.l.b16 %v865
    %v1556 = vunpack.c.l.b16 %v866
    %v1557 = vunpack.c.h.b16 %v866
    %v1558 = vunpack.c.l.b16 %v867
    %v1559 = vunpack.c.h.b16 %v867
    %v1560 = vunpack.c.l.b16 %v868
    %v1561 = vunpack.c.h.b16 %v868
    %v1562 = vunpack.c.l.b16 %v869
    %v1563 = vunpack.c.l.b16 %v870
    %v1564 = vunpack.c.h.b16 %v870
    %v1565 = vunpack.c.l.b16 %v871
    %v1566 = vunpack.c.h.b16 %v871
    %v1567 = vunpack.c.l.b16 %v872
    %v1568 = vunpack.c.h.b16 %v872
    %v1569 = vunpack.c.l.b16 %v873
    %v1570 = vunpack.c.l.b16 %v874
    %v1571 = vunpack.c.h.b16 %v874
    %v1572 = vunpack.c.l.b16 %v875
    %v1573 = vunpack.c.h.b16 %v875
    %v1574 = vunpack.c.l.b16 %v876
    %v1575 = vunpack.c.h.b16 %v876
    %v1576 = vunpack.c.l.b16 %v877
    %v1577 = vunpack.c.l.b16 %v878
    %v1578 = vunpack.c.h.b16 %v878
    %v1579 = vunpack.c.l.b16 %v879
    %v1580 = vunpack.c.h.b16 %v879
    %v1581 = vunpack.c.l.b16 %v880
    %v1582 = vunpack.c.h.b16 %v880
    %v1583 = vunpack.c.l.b16 %v881
    %v1584 = vunpack.c.l.b16 %v882
    %v1585 = vunpack.c.h.b16 %v882
    %v1586 = vunpack.c.l.b16 %v883
    %v1587 = vunpack.c.h.b16 %v883
    %v1588 = vunpack.c.l.b16 %v884
    %v1589 = vunpack.c.h.b16 %v884
    %v1590 = vunpack.c.l.b16 %v885
    %v1591 = vunpack.c.l.b16 %v886
    %v1592 = vunpack.c.h.b16 %v886
    %v1593 = vunpack.c.l.b16 %v887
    %v1594 = vunpack.c.h.b16 %v887
    %v1595 = vunpack.c.l.b16 %v888
    %v1596 = vunpack.c.h.b16 %v888
    %v1597 = vunpack.c.l.b16 %v889
    %v1598 = vunpack.c.l.b16 %v890
    %v1599 = vunpack.c.h.b16 %v890
    %v1600 = vunpack.c.l.b16 %v891
    %v1601 = vunpack.c.h.b16 %v891
    %v1602 = vunpack.c.l.b16 %v892
    %v1603 = vunpack.c.h.b16 %v892
    %v1604 = vunpack.c.l.b16 %v893
    %v1605 = vunpack.c.l.b16 %v894
    %v1606 = vunpack.c.h.b16 %v894
    %v1607 = vunpack.c.l.b16 %v895
    %v1608 = vunpack.c.h.b16 %v895
    %v1609 = vunpack.c.l.b16 %v896
    %v1610 = vunpack.c.h.b16 %v896
    %v1611 = vunpack.c.l.b16 %v897
    %v1612 = vunpack.c.l.b16 %v898
    %v1613 = vunpack.c.h.b16 %v898
    %v1614 = vunpack.c.l.b16 %v899
    %v1615 = vunpack.c.h.b16 %v899
    %v1616 = vunpack.c.l.b16 %v900
    %v1617 = vunpack.c.h.b16 %v900
    %v1618 = vunpack.c.l.b16 %v901
    %v1619 = vunpack.c.l.b16 %v902
    %v1620 = vunpack.c.h.b16 %v902
    %v1621 = vunpack.c.l.b16 %v903
    %v1622 = vunpack.c.h.b16 %v903
    %v1623 = vunpack.c.l.b16 %v904
    %v1624 = vunpack.c.h.b16 %v904
    %v1625 = vunpack.c.l.b16 %v905
    %v1626 = vunpack.c.l.b16 %v906
    %v1627 = vunpack.c.h.b16 %v906
    %v1628 = vunpack.c.l.b16 %v907
    %v1629 = vunpack.c.h.b16 %v907
    %v1630 = vunpack.c.l.b16 %v908
    %v1631 = vunpack.c.h.b16 %v908
    %v1632 = vunpack.c.l.b16 %v909
    %v1633 = vunpack.c.l.b16 %v910
    %v1634 = vunpack.c.h.b16 %v910
    %v1635 = vunpack.c.l.b16 %v911
    %v1636 = vunpack.c.h.b16 %v911
    %v1637 = vunpack.c.l.b16 %v912
    %v1638 = vunpack.c.h.b16 %v912
    %v1639 = vunpack.c.l.b16 %v913
    %v1640 = vunpack.c.l.b16 %v914
    %v1641 = vunpack.c.h.b16 %v914
    %v1642 = vunpack.c.l.b16 %v915
    %v1643 = vunpack.c.h.b16 %v915
    %v1644 = vunpack.c.l.b16 %v916
    %v1645 = vunpack.c.h.b16 %v916
    %v1646 = vunpack.c.l.b16 %v917
    %v1647 = vunpack.c.l.b16 %v918
    %v1648 = vunpack.c.h.b16 %v918
    %v1649 = vunpack.c.l.b16 %v919
    %v1650 = vunpack.c.h.b16 %v919
    %v1651 = vunpack.c.l.b16 %v920
    %v1652 = vunpack.c.h.b16 %v920
    %v1653 = vunpack.c.l.b16 %v921
    %v1654 = vunpack.c.l.b16 %v922
    %v1655 = vunpack.c.h.b16 %v922
    %v1656 = vunpack.c.l.b16 %v923
    %v1657 = vunpack.c.h.b16 %v923
    %v1658 = vunpack.c.l.b16 %v924
    %v1659 = vunpack.c.h.b16 %v924
    %v1660 = vunpack.c.l.b16 %v925
    %v1661 = vunpack.c.l.b16 %v926
    %v1662 = vunpack.c.h.b16 %v926
    %v1663 = vunpack.c.l.b16 %v927
    %v1664 = vunpack.c.h.b16 %v927
    %v1665 = vunpack.c.l.b16 %v928
    %v1666 = vunpack.c.h.b16 %v928
    %v1667 = vunpack.c.l.b16 %v929
    %v1668 = vunpack.c.l.b16 %v930
    %v1669 = vunpack.c.h.b16 %v930
    %v1670 = vunpack.c.l.b16 %v931
    %v1671 = vunpack.c.h.b16 %v931
    %v1672 = vunpack.c.l.b16 %v932
    %v1673 = vunpack.c.h.b16 %v932
    %v1674 = vunpack.c.l.b16 %v933
    %v1675 = vpack.c.b16 %v1234, %v1227
    %v1676 = vpack.c.b16 %v1235, %v1228
    %v1677 = vpack.c.b16 %v1236, %v1229
    %v1678 = vpack.c.b16 %v1237, %v1230
    %v1679 = vpack.c.b16 %v1238, %v1231
    %v1680 = vpack.c.b16 %v1239, %v1232
    %v1681 = vpack.c.b16 %v1240, %v1233
    %v1682 = vpack.c.b16 %v1248, %v1241
    %v1683 = vpack.c.b16 %v1249, %v1242
    %v1684 = vpack.c.b16 %v1250, %v1243
    %v1685 = vpack.c.b16 %v1251, %v1244
    %v1686 = vpack.c.b16 %v1252, %v1245
    %v1687 = vpack.c.b16 %v1253, %v1246
    %v1688 = vpack.c.b16 %v1254, %v1247
    %v1689 = vpack.c.b16 %v1262, %v1255
    %v1690 = vpack.c.b16 %v1263, %v1256
    %v1691 = vpack.c.b16 %v1264, %v1257
    %v1692 = vpack.c.b16 %v1265, %v1258
    %v1693 = vpack.c.b16 %v1266, %v1259
    %v1694 = vpack.c.b16 %v1267, %v1260
    %v1695 = vpack.c.b16 %v1268, %v1261
    %v1696 = vpack.c.b16 %v1276, %v1269
    %v1697 = vpack.c.b16 %v1277, %v1270
    %v1698 = vpack.c.b16 %v1278, %v1271
    %v1699 = vpack.c.b16 %v1279, %v1272
    %v1700 = vpack.c.b16 %v1280, %v1273
    %v1701 = vpack.c.b16 %v1281, %v1274
    %v1702 = vpack.c.b16 %v1282, %v1275
    %v1703 = vpack.c.b16 %v1290, %v1283
    %v1704 = vpack.c.b16 %v1291, %v1284
    %v1705 = vpack.c.b16 %v1292, %v1285
    %v1706 = vpack.c.b16 %v1293, %v1286
    %v1707 = vpack.c.b16 %v1294, %v1287
    %v1708 = vpack.c.b16 %v1295, %v1288
    %v1709 = vpack.c.b16 %v1296, %v1289
    %v1710 = vpack.c.b16 %v1304, %v1297
    %v1711 = vpack.c.b16 %v1305, %v1298
    %v1712 = vpack.c.b16 %v1306, %v1299
    %v1713 = vpack.c.b16 %v1307, %v1300
    %v1714 = vpack.c.b16 %v1308, %v1301
    %v1715 = vpack.c.b16 %v1309, %v1302
    %v1716 = vpack.c.b16 %v1310, %v1303
    %v1717 = vpack.c.b16 %v1318, %v1311
    %v1718 = vpack.c.b16 %v1319, %v1312
    %v1719 = vpack.c.b16 %v1320, %v1313
    %v1720 = vpack.c.b16 %v1321, %v1314
    %v1721 = vpack.c.b16 %v1322, %v1315
    %v1722 = vpack.c.b16 %v1323, %v1316
    %v1723 = vpack.c.b16 %v1324, %v1317
    %v1724 = vpack.c.b16 %v1332, %v1325
    %v1725 = vpack.c.b16 %v1333, %v1326
    %v1726 = vpack.c.b16 %v1334, %v1327
    %v1727 = vpack.c.b16 %v1335, %v1328
    %v1728 = vpack.c.b16 %v1336, %v1329
    %v1729 = vpack.c.b16 %v1337, %v1330
    %v1730 = vpack.c.b16 %v1338, %v1331
    %v1731 = vpack.c.b16 %v1346, %v1339
    %v1732 = vpack.c.b16 %v1347, %v1340
    %v1733 = vpack.c.b16 %v1348, %v1341
    %v1734 = vpack.c.b16 %v1349, %v1342
    %v1735 = vpack.c.b16 %v1350, %v1343
    %v1736 = vpack.c.b16 %v1351, %v1344
    %v1737 = vpack.c.b16 %v1352, %v1345
    %v1738 = vpack.c.b16 %v1360, %v1353
    %v1739 = vpack.c.b16 %v1361, %v1354
    %v1740 = vpack.c.b16 %v1362, %v1355
    %v1741 = vpack.c.b16 %v1363, %v1356
    %v1742 = vpack.c.b16 %v1364, %v1357
    %v1743 = vpack.c.b16 %v1365, %v1358
    %v1744 = vpack.c.b16 %v1366, %v1359
    %v1745 = vpack.c.b16 %v1374, %v1367
    %v1746 = vpack.c.b16 %v1375, %v1368
    %v1747 = vpack.c.b16 %v1376, %v1369
    %v1748 = vpack.c.b16 %v1377, %v1370
    %v1749 = vpack.c.b16 %v1378, %v1371
    %v1750 = vpack.c.b16 %v1379, %v1372
    %v1751 = vpack.c.b16 %v1380, %v1373
    %v1752 = vpack.c.b16 %v1388, %v1381
    %v1753 = vpack.c.b16 %v1389, %v1382
    %v1754 = vpack.c.b16 %v1390, %v1383
    %v1755 = vpack.c.b16 %v1391, %v1384
    %v1756 = vpack.c.b16 %v1392, %v1385
    %v1757 = vpack.c.b16 %v1393, %v1386
    %v1758 = vpack.c.b16 %v1394, %v1387
    %v1759 = vpack.c.b16 %v1402, %v1395
    %v1760 = vpack.c.b16 %v1403, %v1396
    %v1761 = vpack.c.b16 %v1404, %v1397
    %v1762 = vpack.c.b16 %v1405, %v1398
    %v1763 = vpack.c.b16 %v1406, %v1399
    %v1764 = vpack.c.b16 %v1407, %v1400
    %v1765 = vpack.c.b16 %v1408, %v1401
    %v1766 = vpack.c.b16 %v1416, %v1409
    %v1767 = vpack.c.b16 %v1417, %v1410
    %v1768 = vpack.c.b16 %v1418, %v1411
    %v1769 = vpack.c.b16 %v1419, %v1412
    %v1770 = vpack.c.b16 %v1420, %v1413
    %v1771 = vpack.c.b16 %v1421, %v1414
    %v1772 = vpack.c.b16 %v1422, %v1415
    %v1773 = vpack.c.b16 %v1430, %v1423
    %v1774 = vpack.c.b16 %v1431, %v1424
    %v1775 = vpack.c.b16 %v1432, %v1425
    %v1776 = vpack.c.b16 %v1433, %v1426
    %v1777 = vpack.c.b16 %v1434, %v1427
    %v1778 = vpack.c.b16 %v1435, %v1428
    %v1779 = vpack.c.b16 %v1436, %v1429
    %v1780 = vpack.c.b16 %v1444, %v1437
    %v1781 = vpack.c.b16 %v1445, %v1438
    %v1782 = vpack.c.b16 %v1446, %v1439
    %v1783 = vpack.c.b16 %v1447, %v1440
    %v1784 = vpack.c.b16 %v1448, %v1441
    %v1785 = vpack.c.b16 %v1449, %v1442
    %v1786 = vpack.c.b16 %v1450, %v1443
    %v1787 = vpack.c.b16 %v1458, %v1451
    %v1788 = vpack.c.b16 %v1459, %v1452
    %v1789 = vpack.c.b16 %v1460, %v1453
    %v1790 = vpack.c.b16 %v1461, %v1454
    %v1791 = vpack.c.b16 %v1462, %v1455
    %v1792 = vpack.c.b16 %v1463, %v1456
    %v1793 = vpack.c.b16 %v1464, %v1457
    %v1794 = vpack.c.b16 %v1472, %v1465
    %v1795 = vpack.c.b16 %v1473, %v1466
    %v1796 = vpack.c.b16 %v1474, %v1467
    %v1797 = vpack.c.b16 %v1475, %v1468
    %v1798 = vpack.c.b16 %v1476, %v1469
    %v1799 = vpack.c.b16 %v1477, %v1470
    %v1800 = vpack.c.b16 %v1478, %v1471
    %v1801 = vpack.c.b16 %v1486, %v1479
    %v1802 = vpack.c.b16 %v1487, %v1480
    %v1803 = vpack.c.b16 %v1488, %v1481
    %v1804 = vpack.c.b16 %v1489, %v1482
    %v1805 = vpack.c.b16 %v1490, %v1483
    %v1806 = vpack.c.b16 %v1491, %v1484
    %v1807 = vpack.c.b16 %v1492, %v1485
    %v1808 = vpack.c.b16 %v1500, %v1493
    %v1809 = vpack.c.b16 %v1501, %v1494
    %v1810 = vpack.c.b16 %v1502, %v1495
    %v1811 = vpack.c.b16 %v1503, %v1496
    %v1812 = vpack.c.b16 %v1504, %v1497
    %v1813 = vpack.c.b16 %v1505, %v1498
    %v1814 = vpack.c.b16 %v1506, %v1499
    %v1815 = vpack.c.b16 %v1514, %v1507
    %v1816 = vpack.c.b16 %v1515, %v1508
    %v1817 = vpack.c.b16 %v1516, %v1509
    %v1818 = vpack.c.b16 %v1517, %v1510
    %v1819 = vpack.c.b16 %v1518, %v1511
    %v1820 = vpack.c.b16 %v1519, %v1512
    %v1821 = vpack.c.b16 %v1520, %v1513
    %v1822 = vpack.c.b16 %v1528, %v1521
    %v1823 = vpack.c.b16 %v1529, %v1522
    %v1824 = vpack.c.b16 %v1530, %v1523
    %v1825 = vpack.c.b16 %v1531, %v1524
    %v1826 = vpack.c.b16 %v1532, %v1525
    %v1827 = vpack.c.b16 %v1533, %v1526
    %v1828 = vpack.c.b16 %v1534, %v1527
    %v1829 = vpack.c.b16 %v1542, %v1535
    %v1830 = vpack.c.b16 %v1543, %v1536
    %v1831 = vpack.c.b16 %v1544, %v1537
    %v1832 = vpack.c.b16 %v1545, %v1538
    %v1833 = vpack.c.b16 %v1546, %v1539
    %v1834 = vpack.c.b16 %v1547, %v1540
    %v1835 = vpack.c.b16 %v1548, %v1541
    %v1836 = vpack.c.b16 %v1556, %v1549
    %v1837 = vpack.c.b16 %v1557, %v1550
    %v1838 = vpack.c.b16 %v1558, %v1551
    %v1839 = vpack.c.b16 %v1559, %v1552
    %v1840 = vpack.c.b16 %v1560, %v1553
    %v1841 = vpack.c.b16 %v1561, %v1554
    %v1842 = vpack.c.b16 %v1562, %v1555
    %v1843 = vpack.c.b16 %v1570, %v1563
    %v1844 = vpack.c.b16 %v1571, %v1564
    %v1845 = vpack.c.b16 %v1572, %v1565
    %v1846 = vpack.c.b16 %v1573, %v1566
    %v1847 = vpack.c.b16 %v1574, %v1567
    %v1848 = vpack.c.b16 %v1575, %v1568
    %v1849 = vpack.c.b16 %v1576, %v1569
    %v1850 = vpack.c.b16 %v1584, %v1577
    %v1851 = vpack.c.b16 %v1585, %v1578
    %v1852 = vpack.c.b16 %v1586, %v1579
    %v1853 = vpack.c.b16 %v1587, %v1580
    %v1854 = vpack.c.b16 %v1588, %v1581
    %v1855 = vpack.c.b16 %v1589, %v1582
    %v1856 = vpack.c.b16 %v1590, %v1583
    %v1857 = vpack.c.b16 %v1598, %v1591
    %v1858 = vpack.c.b16 %v1599, %v1592
    %v1859 = vpack.c.b16 %v1600, %v1593
    %v1860 = vpack.c.b16 %v1601, %v1594
    %v1861 = vpack.c.b16 %v1602, %v1595
    %v1862 = vpack.c.b16 %v1603, %v1596
    %v1863 = vpack.c.b16 %v1604, %v1597
    %v1864 = vpack.c.b16 %v1612, %v1605
    %v1865 = vpack.c.b16 %v1613, %v1606
    %v1866 = vpack.c.b16 %v1614, %v1607
    %v1867 = vpack.c.b16 %v1615, %v1608
    %v1868 = vpack.c.b16 %v1616, %v1609
    %v1869 = vpack.c.b16 %v1617, %v1610
    %v1870 = vpack.c.b16 %v1618, %v1611
    %v1871 = vpack.c.b16 %v1626, %v1619
    %v1872 = vpack.c.b16 %v1627, %v1620
    %v1873 = vpack.c.b16 %v1628, %v1621
    %v1874 = vpack.c.b16 %v1629, %v1622
    %v1875 = vpack.c.b16 %v1630, %v1623
    %v1876 = vpack.c.b16 %v1631, %v1624
    %v1877 = vpack.c.b16 %v1632, %v1625
    %v1878 = vpack.c.b16 %v1640, %v1633
    %v1879 = vpack.c.b16 %v1641, %v1634
    %v1880 = vpack.c.b16 %v1642, %v1635
    %v1881 = vpack.c.b16 %v1643, %v1636
    %v1882 = vpack.c.b16 %v1644, %v1637
    %v1883 = vpack.c.b16 %v1645, %v1638
    %v1884 = vpack.c.b16 %v1646, %v1639
    %v1885 = vpack.c.b16 %v1654, %v1647
    %v1886 = vpack.c.b16 %v1655, %v1648
    %v1887 = vpack.c.b16 %v1656, %v1649
    %v1888 = vpack.c.b16 %v1657, %v1650
    %v1889 = vpack.c.b16 %v1658, %v1651
    %v1890 = vpack.c.b16 %v1659, %v1652
    %v1891 = vpack.c.b16 %v1660, %v1653
    %v1892 = vpack.c.b16 %v1668, %v1661
    %v1893 = vpack.c.b16 %v1669, %v1662
    %v1894 = vpack.c.b16 %v1670, %v1663
    %v1895 = vpack.c.b16 %v1671, %v1664
    %v1896 = vpack.c.b16 %v1672, %v1665
    %v1897 = vpack.c.b16 %v1673, %v1666
    %v1898 = vpack.c.b16 %v1674, %v1667
    %2123 = vmatprep.subr.bf16.mxu0 %v1676
    %2124 = vmatpush1.bf16.msra.mxu0 %v1675
    %2125 = vmatprep.subr.bf16.mxu0 %v1683
    %2126 = vmatpush1.bf16.msra.mxu0 %v1682
    %2127 = vmatprep.subr.bf16.mxu0 %v1690
    %2128 = vmatpush1.bf16.msra.mxu0 %v1689
    %2129 = vmatprep.subr.bf16.mxu0 %v1697
    %2130 = vmatpush1.bf16.msra.mxu0 %v1696
    %2131 = vmatprep.subr.bf16.mxu0 %v1704
    %2132 = vmatpush1.bf16.msra.mxu0 %v1703
    %2133 = vmatprep.subr.bf16.mxu0 %v1711
    %2134 = vmatpush1.bf16.msra.mxu0 %v1710
    %2135 = vmatprep.subr.bf16.mxu0 %v1718
    %2136 = vmatpush1.bf16.msra.mxu0 %v1717
    %2137 = vmatprep.subr.bf16.mxu0 %v1725
    %2138 = vmatpush1.bf16.msra.mxu0 %v1724
    %2139 = vmatprep.subr.bf16.mxu0 %v1732
    %2140 = vmatpush1.bf16.msra.mxu0 %v1731
    %2141 = vmatprep.subr.bf16.mxu0 %v1739
    %2142 = vmatpush1.bf16.msra.mxu0 %v1738
    %2143 = vmatprep.subr.bf16.mxu0 %v1746
    %2144 = vmatpush1.bf16.msra.mxu0 %v1745
    %2145 = vmatprep.subr.bf16.mxu0 %v1753
    %2146 = vmatpush1.bf16.msra.mxu0 %v1752
    %2147 = vmatprep.subr.bf16.mxu0 %v1760
    %2148 = vmatpush1.bf16.msra.mxu0 %v1759
    %2149 = vmatprep.subr.bf16.mxu0 %v1767
    %2150 = vmatpush1.bf16.msra.mxu0 %v1766
    %2151 = vmatprep.subr.bf16.mxu0 %v1774
    %2152 = vmatpush1.bf16.msra.mxu0 %v1773
    %2153 = vmatprep.subr.bf16.mxu0 %v1781
    %2154 = vmatpush1.bf16.msra.mxu0 %v1780
    %2155 = vmatprep.mubr.bf16.mxu0 %v675
    %2156 = vmatmul.mubr.bf16.gmra.mrb[0].mxu0 %v674
    %v2157 = vpop.f32.mrb[0].mxu0
    %v2158 = vadd.f32 %v939, %v2157
    %v2159 = vpop.f32.mrb[0].mxu0
    %v2160 = vadd.f32 %v943, %v2159
    %v2161 = vpop.f32.mrb[0].mxu0
    %v2162 = vpop.f32.mrb[0].mxu0
    %2163 = vdwg.mxu0
    %2164 = vmatprep.subr.bf16.mxu0 %v1788
    %2165 = vmatpush1.bf16.msra.mxu0 %v1787
    %2166 = vmatprep.subr.bf16.mxu0 %v1795
    %2167 = vmatpush1.bf16.msra.mxu0 %v1794
    %2168 = vmatprep.subr.bf16.mxu0 %v1802
    %2169 = vmatpush1.bf16.msra.mxu0 %v1801
    %2170 = vmatprep.subr.bf16.mxu0 %v1809
    %2171 = vmatpush1.bf16.msra.mxu0 %v1808
    %2172 = vmatprep.subr.bf16.mxu0 %v1816
    %2173 = vmatpush1.bf16.msra.mxu0 %v1815
    %2174 = vmatprep.subr.bf16.mxu0 %v1823
    %2175 = vmatpush1.bf16.msra.mxu0 %v1822
    %2176 = vmatprep.subr.bf16.mxu0 %v1830
    %2177 = vmatpush1.bf16.msra.mxu0 %v1829
    %2178 = vmatprep.subr.bf16.mxu0 %v1837
    %2179 = vmatpush1.bf16.msra.mxu0 %v1836
    %2180 = vmatprep.subr.bf16.mxu0 %v1844
    %2181 = vmatpush1.bf16.msra.mxu0 %v1843
    %2182 = vmatprep.subr.bf16.mxu0 %v1851
    %2183 = vmatpush1.bf16.msra.mxu0 %v1850
    %2184 = vmatprep.subr.bf16.mxu0 %v1858
    %2185 = vmatpush1.bf16.msra.mxu0 %v1857
    %2186 = vmatprep.subr.bf16.mxu0 %v1865
    %2187 = vmatpush1.bf16.msra.mxu0 %v1864
    %2188 = vmatprep.subr.bf16.mxu0 %v1872
    %2189 = vmatpush1.bf16.msra.mxu0 %v1871
    %2190 = vmatprep.subr.bf16.mxu0 %v1879
    %2191 = vmatpush1.bf16.msra.mxu0 %v1878
    %2192 = vmatprep.subr.bf16.mxu0 %v1886
    %2193 = vmatpush1.bf16.msra.mxu0 %v1885
    %2194 = vmatprep.subr.bf16.mxu0 %v1893
    %2195 = vmatpush1.bf16.msra.mxu0 %v1892
    %2196 = vmatprep.mubr.bf16.mxu0 %v677
    %2197 = vmatmul.mubr.bf16.gmra.mrb[0].mxu0 %v676
    %v2198 = vpop.f32.mrb[0].mxu0
    %v2199 = vadd.f32 %v2158, %v2198
    %v2200 = vpop.f32.mrb[0].mxu0
    %v2201 = vadd.f32 %v2160, %v2200
    %v2202 = vpop.f32.mrb[0].mxu0
    %v2203 = vpop.f32.mrb[0].mxu0
    %2204 = vdwg.mxu0
    %2205 = vmatprep.subr.bf16.mxu0 %v1678
    %2206 = vmatpush1.bf16.msra.mxu0 %v1677
    %2207 = vmatprep.subr.bf16.mxu0 %v1685
    %2208 = vmatpush1.bf16.msra.mxu0 %v1684
    %2209 = vmatprep.subr.bf16.mxu0 %v1692
    %2210 = vmatpush1.bf16.msra.mxu0 %v1691
    %2211 = vmatprep.subr.bf16.mxu0 %v1699
    %2212 = vmatpush1.bf16.msra.mxu0 %v1698
    %2213 = vmatprep.subr.bf16.mxu0 %v1706
    %2214 = vmatpush1.bf16.msra.mxu0 %v1705
    %2215 = vmatprep.subr.bf16.mxu0 %v1713
    %2216 = vmatpush1.bf16.msra.mxu0 %v1712
    %2217 = vmatprep.subr.bf16.mxu0 %v1720
    %2218 = vmatpush1.bf16.msra.mxu0 %v1719
    %2219 = vmatprep.subr.bf16.mxu0 %v1727
    %2220 = vmatpush1.bf16.msra.mxu0 %v1726
    %2221 = vmatprep.subr.bf16.mxu0 %v1734
    %2222 = vmatpush1.bf16.msra.mxu0 %v1733
    %2223 = vmatprep.subr.bf16.mxu0 %v1741
    %2224 = vmatpush1.bf16.msra.mxu0 %v1740
    %2225 = vmatprep.subr.bf16.mxu0 %v1748
    %2226 = vmatpush1.bf16.msra.mxu0 %v1747
    %2227 = vmatprep.subr.bf16.mxu0 %v1755
    %2228 = vmatpush1.bf16.msra.mxu0 %v1754
    %2229 = vmatprep.subr.bf16.mxu0 %v1762
    %2230 = vmatpush1.bf16.msra.mxu0 %v1761
    %2231 = vmatprep.subr.bf16.mxu0 %v1769
    %2232 = vmatpush1.bf16.msra.mxu0 %v1768
    %2233 = vmatprep.subr.bf16.mxu0 %v1776
    %2234 = vmatpush1.bf16.msra.mxu0 %v1775
    %2235 = vmatprep.subr.bf16.mxu0 %v1783
    %2236 = vmatpush1.bf16.msra.mxu0 %v1782
    %2237 = vmatprep.mubr.bf16.mxu0 %v675
    %2238 = vmatmul.mubr.bf16.gmra.mrb[0].mxu0 %v674
    %v2239 = vpop.f32.mrb[0].mxu0
    %v2240 = vadd.f32 %v947, %v2239
    %v2241 = vpop.f32.mrb[0].mxu0
    %v2242 = vadd.f32 %v951, %v2241
    %v2243 = vpop.f32.mrb[0].mxu0
    %v2244 = vpop.f32.mrb[0].mxu0
    %2245 = vdwg.mxu0
    %2246 = vmatprep.subr.bf16.mxu0 %v1790
    %2247 = vmatpush1.bf16.msra.mxu0 %v1789
    %2248 = vmatprep.subr.bf16.mxu0 %v1797
    %2249 = vmatpush1.bf16.msra.mxu0 %v1796
    %2250 = vmatprep.subr.bf16.mxu0 %v1804
    %2251 = vmatpush1.bf16.msra.mxu0 %v1803
    %2252 = vmatprep.subr.bf16.mxu0 %v1811
    %2253 = vmatpush1.bf16.msra.mxu0 %v1810
    %2254 = vmatprep.subr.bf16.mxu0 %v1818
    %2255 = vmatpush1.bf16.msra.mxu0 %v1817
    %2256 = vmatprep.subr.bf16.mxu0 %v1825
    %2257 = vmatpush1.bf16.msra.mxu0 %v1824
    %2258 = vmatprep.subr.bf16.mxu0 %v1832
    %2259 = vmatpush1.bf16.msra.mxu0 %v1831
    %2260 = vmatprep.subr.bf16.mxu0 %v1839
    %2261 = vmatpush1.bf16.msra.mxu0 %v1838
    %2262 = vmatprep.subr.bf16.mxu0 %v1846
    %2263 = vmatpush1.bf16.msra.mxu0 %v1845
    %2264 = vmatprep.subr.bf16.mxu0 %v1853
    %2265 = vmatpush1.bf16.msra.mxu0 %v1852
    %2266 = vmatprep.subr.bf16.mxu0 %v1860
    %2267 = vmatpush1.bf16.msra.mxu0 %v1859
    %2268 = vmatprep.subr.bf16.mxu0 %v1867
    %2269 = vmatpush1.bf16.msra.mxu0 %v1866
    %2270 = vmatprep.subr.bf16.mxu0 %v1874
    %2271 = vmatpush1.bf16.msra.mxu0 %v1873
    %2272 = vmatprep.subr.bf16.mxu0 %v1881
    %2273 = vmatpush1.bf16.msra.mxu0 %v1880
    %2274 = vmatprep.subr.bf16.mxu0 %v1888
    %2275 = vmatpush1.bf16.msra.mxu0 %v1887
    %2276 = vmatprep.subr.bf16.mxu0 %v1895
    %2277 = vmatpush1.bf16.msra.mxu0 %v1894
    %2278 = vmatprep.mubr.bf16.mxu0 %v677
    %2279 = vmatmul.mubr.bf16.gmra.mrb[0].mxu0 %v676
    %v2280 = vpop.f32.mrb[0].mxu0
    %v2281 = vadd.f32 %v2240, %v2280
    %v2282 = vpop.f32.mrb[0].mxu0
    %v2283 = vadd.f32 %v2242, %v2282
    %v2284 = vpop.f32.mrb[0].mxu0
    %v2285 = vpop.f32.mrb[0].mxu0
    %2286 = vdwg.mxu0
    %2287 = vmatprep.subr.bf16.mxu0 %v1680
    %2288 = vmatpush1.bf16.msra.mxu0 %v1679
    %2289 = vmatprep.subr.bf16.mxu0 %v1687
    %2290 = vmatpush1.bf16.msra.mxu0 %v1686
    %2291 = vmatprep.subr.bf16.mxu0 %v1694
    %2292 = vmatpush1.bf16.msra.mxu0 %v1693
    %2293 = vmatprep.subr.bf16.mxu0 %v1701
    %2294 = vmatpush1.bf16.msra.mxu0 %v1700
    %2295 = vmatprep.subr.bf16.mxu0 %v1708
    %2296 = vmatpush1.bf16.msra.mxu0 %v1707
    %2297 = vmatprep.subr.bf16.mxu0 %v1715
    %2298 = vmatpush1.bf16.msra.mxu0 %v1714
    %2299 = vmatprep.subr.bf16.mxu0 %v1722
    %2300 = vmatpush1.bf16.msra.mxu0 %v1721
    %2301 = vmatprep.subr.bf16.mxu0 %v1729
    %2302 = vmatpush1.bf16.msra.mxu0 %v1728
    %2303 = vmatprep.subr.bf16.mxu0 %v1736
    %2304 = vmatpush1.bf16.msra.mxu0 %v1735
    %2305 = vmatprep.subr.bf16.mxu0 %v1743
    %2306 = vmatpush1.bf16.msra.mxu0 %v1742
    %2307 = vmatprep.subr.bf16.mxu0 %v1750
    %2308 = vmatpush1.bf16.msra.mxu0 %v1749
    %2309 = vmatprep.subr.bf16.mxu0 %v1757
    %2310 = vmatpush1.bf16.msra.mxu0 %v1756
    %2311 = vmatprep.subr.bf16.mxu0 %v1764
    %2312 = vmatpush1.bf16.msra.mxu0 %v1763
    %2313 = vmatprep.subr.bf16.mxu0 %v1771
    %2314 = vmatpush1.bf16.msra.mxu0 %v1770
    %2315 = vmatprep.subr.bf16.mxu0 %v1778
    %2316 = vmatpush1.bf16.msra.mxu0 %v1777
    %2317 = vmatprep.subr.bf16.mxu0 %v1785
    %2318 = vmatpush1.bf16.msra.mxu0 %v1784
    %2319 = vmatprep.mubr.bf16.mxu0 %v675
    %2320 = vmatmul.mubr.bf16.gmra.mrb[0].mxu0 %v674
    %v2321 = vpop.f32.mrb[0].mxu0
    %v2322 = vadd.f32 %v955, %v2321
    %v2323 = vpop.f32.mrb[0].mxu0
    %v2324 = vadd.f32 %v959, %v2323
    %v2325 = vpop.f32.mrb[0].mxu0
    %v2326 = vpop.f32.mrb[0].mxu0
    %2327 = vdwg.mxu0
    %2328 = vmatprep.subr.bf16.mxu0 %v1792
    %2329 = vmatpush1.bf16.msra.mxu0 %v1791
    %2330 = vmatprep.subr.bf16.mxu0 %v1799
    %2331 = vmatpush1.bf16.msra.mxu0 %v1798
    %2332 = vmatprep.subr.bf16.mxu0 %v1806
    %2333 = vmatpush1.bf16.msra.mxu0 %v1805
    %2334 = vmatprep.subr.bf16.mxu0 %v1813
    %2335 = vmatpush1.bf16.msra.mxu0 %v1812
    %2336 = vmatprep.subr.bf16.mxu0 %v1820
    %2337 = vmatpush1.bf16.msra.mxu0 %v1819
    %2338 = vmatprep.subr.bf16.mxu0 %v1827
    %2339 = vmatpush1.bf16.msra.mxu0 %v1826
    %2340 = vmatprep.subr.bf16.mxu0 %v1834
    %2341 = vmatpush1.bf16.msra.mxu0 %v1833
    %2342 = vmatprep.subr.bf16.mxu0 %v1841
    %2343 = vmatpush1.bf16.msra.mxu0 %v1840
    %2344 = vmatprep.subr.bf16.mxu0 %v1848
    %2345 = vmatpush1.bf16.msra.mxu0 %v1847
    %2346 = vmatprep.subr.bf16.mxu0 %v1855
    %2347 = vmatpush1.bf16.msra.mxu0 %v1854
    %2348 = vmatprep.subr.bf16.mxu0 %v1862
    %2349 = vmatpush1.bf16.msra.mxu0 %v1861
    %2350 = vmatprep.subr.bf16.mxu0 %v1869
    %2351 = vmatpush1.bf16.msra.mxu0 %v1868
    %2352 = vmatprep.subr.bf16.mxu0 %v1876
    %2353 = vmatpush1.bf16.msra.mxu0 %v1875
    %2354 = vmatprep.subr.bf16.mxu0 %v1883
    %2355 = vmatpush1.bf16.msra.mxu0 %v1882
    %2356 = vmatprep.subr.bf16.mxu0 %v1890
    %2357 = vmatpush1.bf16.msra.mxu0 %v1889
    %2358 = vmatprep.subr.bf16.mxu0 %v1897
    %2359 = vmatpush1.bf16.msra.mxu0 %v1896
    %2360 = vmatprep.mubr.bf16.mxu0 %v677
    %2361 = vmatmul.mubr.bf16.gmra.mrb[0].mxu0 %v676
    %v2362 = vpop.f32.mrb[0].mxu0
    %v2363 = vadd.f32 %v2322, %v2362
    %v2364 = vpop.f32.mrb[0].mxu0
    %v2365 = vadd.f32 %v2324, %v2364
    %v2366 = vpop.f32.mrb[0].mxu0
    %v2367 = vpop.f32.mrb[0].mxu0
    %2368 = vdwg.mxu0
    %2369 = vmatprep.subr.bf16.mxu0 0
    %2370 = vmatpush1.bf16.msra.mxu0 %v1681
    %2371 = vmatprep.subr.bf16.mxu0 0
    %2372 = vmatpush1.bf16.msra.mxu0 %v1688
    %2373 = vmatprep.subr.bf16.mxu0 0
    %2374 = vmatpush1.bf16.msra.mxu0 %v1695
    %2375 = vmatprep.subr.bf16.mxu0 0
    %2376 = vmatpush1.bf16.msra.mxu0 %v1702
    %2377 = vmatprep.subr.bf16.mxu0 0
    %2378 = vmatpush1.bf16.msra.mxu0 %v1709
    %2379 = vmatprep.subr.bf16.mxu0 0
    %2380 = vmatpush1.bf16.msra.mxu0 %v1716
    %2381 = vmatprep.subr.bf16.mxu0 0
    %2382 = vmatpush1.bf16.msra.mxu0 %v1723
    %2383 = vmatprep.subr.bf16.mxu0 0
    %2384 = vmatpush1.bf16.msra.mxu0 %v1730
    %2385 = vmatprep.subr.bf16.mxu0 0
    %2386 = vmatpush1.bf16.msra.mxu0 %v1737
    %2387 = vmatprep.subr.bf16.mxu0 0
    %2388 = vmatpush1.bf16.msra.mxu0 %v1744
    %2389 = vmatprep.subr.bf16.mxu0 0
    %2390 = vmatpush1.bf16.msra.mxu0 %v1751
    %2391 = vmatprep.subr.bf16.mxu0 0
    %2392 = vmatpush1.bf16.msra.mxu0 %v1758
    %2393 = vmatprep.subr.bf16.mxu0 0
    %2394 = vmatpush1.bf16.msra.mxu0 %v1765
    %2395 = vmatprep.subr.bf16.mxu0 0
    %2396 = vmatpush1.bf16.msra.mxu0 %v1772
    %2397 = vmatprep.subr.bf16.mxu0 0
    %2398 = vmatpush1.bf16.msra.mxu0 %v1779
    %2399 = vmatprep.subr.bf16.mxu0 0
    %2400 = vmatpush1.bf16.msra.mxu0 %v1786
    %2401 = vmatprep.mubr.bf16.mxu0 %v675
    %2402 = vmatmul.mubr.bf16.gmra.mrb[0].mxu0 %v674
    %v2403 = vpop.f32.mrb[0].mxu0
    %v2404 = vadd.f32 %v963, %v2403
    %v2405 = vpop.f32.mrb[0].mxu0
    %v2406 = vpop.f32.mrb[0].mxu0
    %v2407 = vpop.f32.mrb[0].mxu0
    %2408 = vdwg.mxu0
    %2409 = vmatprep.subr.bf16.mxu0 0
    %2410 = vmatpush1.bf16.msra.mxu0 %v1793
    %2411 = vmatprep.subr.bf16.mxu0 0
    %2412 = vmatpush1.bf16.msra.mxu0 %v1800
    %2413 = vmatprep.subr.bf16.mxu0 0
    %2414 = vmatpush1.bf16.msra.mxu0 %v1807
    %2415 = vmatprep.subr.bf16.mxu0 0
    %2416 = vmatpush1.bf16.msra.mxu0 %v1814
    %2417 = vmatprep.subr.bf16.mxu0 0
    %2418 = vmatpush1.bf16.msra.mxu0 %v1821
    %2419 = vmatprep.subr.bf16.mxu0 0
    %2420 = vmatpush1.bf16.msra.mxu0 %v1828
    %2421 = vmatprep.subr.bf16.mxu0 0
    %2422 = vmatpush1.bf16.msra.mxu0 %v1835
    %2423 = vmatprep.subr.bf16.mxu0 0
    %2424 = vmatpush1.bf16.msra.mxu0 %v1842
    %2425 = vmatprep.subr.bf16.mxu0 0
    %2426 = vmatpush1.bf16.msra.mxu0 %v1849
    %2427 = vmatprep.subr.bf16.mxu0 0
    %2428 = vmatpush1.bf16.msra.mxu0 %v1856
    %2429 = vmatprep.subr.bf16.mxu0 0
    %2430 = vmatpush1.bf16.msra.mxu0 %v1863
    %2431 = vmatprep.subr.bf16.mxu0 0
    %2432 = vmatpush1.bf16.msra.mxu0 %v1870
    %2433 = vmatprep.subr.bf16.mxu0 0
    %2434 = vmatpush1.bf16.msra.mxu0 %v1877
    %2435 = vmatprep.subr.bf16.mxu0 0
    %2436 = vmatpush1.bf16.msra.mxu0 %v1884
    %2437 = vmatprep.subr.bf16.mxu0 0
    %2438 = vmatpush1.bf16.msra.mxu0 %v1891
    %2439 = vmatprep.subr.bf16.mxu0 0
    %2440 = vmatpush1.bf16.msra.mxu0 %v1898
    %2441 = vmatprep.mubr.bf16.mxu0 %v677
    %2442 = vmatmul.mubr.bf16.gmra.mrb[0].mxu0 %v676
    %v2443 = vpop.f32.mrb[0].mxu0
    %v2444 = vadd.f32 %v2404, %v2443
    %v2445 = vpop.f32.mrb[0].mxu0
    %v2446 = vpop.f32.mrb[0].mxu0
    %v2447 = vpop.f32.mrb[0].mxu0
    %2448 = vdwg.mxu0
    %v2449 = vxor.u32 %v2199, 2147483648
    %v2450 = vxor.u32 %v2201, 2147483648
    %v2451 = vxor.u32 %v2281, 2147483648
    %v2452 = vxor.u32 %v2283, 2147483648
    %v2453 = vxor.u32 %v2363, 2147483648
    %v2454 = vxor.u32 %v2365, 2147483648
    %v2455 = vxor.u32 %v2444, 2147483648
    %v2456 = vmul.f32 %v2449, 1.442695
    %v2457 = vpow.pop %v2456
    %v2458 = vmul.f32 %v2450, 1.442695
    %v2459 = vpow.pop %v2458
    %v2460 = vmul.f32 %v2451, 1.442695
    %v2461 = vpow.pop %v2460
    %v2462 = vmul.f32 %v2452, 1.442695
    %v2463 = vpow.pop %v2462
    %v2464 = vmul.f32 %v2453, 1.442695
    %v2465 = vpow.pop %v2464
    %v2466 = vmul.f32 %v2454, 1.442695
    %v2467 = vpow.pop %v2466
    %v2468 = vmul.f32 %v2455, 1.442695
    %v2469 = vpow.pop %v2468
    %v2470 = vadd.f32 %v2457, 1.0
    %v2471 = vadd.f32 %v2459, 1.0
    %v2472 = vadd.f32 %v2461, 1.0
    %v2473 = vadd.f32 %v2463, 1.0
    %v2474 = vadd.f32 %v2465, 1.0
    %v2475 = vadd.f32 %v2467, 1.0
    %v2476 = vadd.f32 %v2469, 1.0
    %v2477 = vrcp.pop %v2470
    %v2478 = vmul.f32 1.0, %v2477
    %v2479 = vrcp.pop %v2471
    %v2480 = vmul.f32 1.0, %v2479
    %v2481 = vrcp.pop %v2472
    %v2482 = vmul.f32 1.0, %v2481
    %v2483 = vrcp.pop %v2473
    %v2484 = vmul.f32 1.0, %v2483
    %v2485 = vrcp.pop %v2474
    %v2486 = vmul.f32 1.0, %v2485
    %v2487 = vrcp.pop %v2475
    %v2488 = vmul.f32 1.0, %v2487
    %v2489 = vrcp.pop %v2476
    %v2490 = vmul.f32 1.0, %v2489
    %2491 = vst [vmem:[#allocation2] sm:$0xff] %v2478
    %2492 = vst [vmem:[#allocation2 + $0x8] sm:$0xff] %v2480
    %2493 = vst [vmem:[#allocation2 + $0x10] sm:$0xff] %v2482
    %2494 = vst [vmem:[#allocation2 + $0x18] sm:$0xff] %v2484
    %2495 = vst [vmem:[#allocation2 + $0x20] sm:$0xff] %v2486
    %2496 = vst [vmem:[#allocation2 + $0x28] sm:$0xff] %v2488
    %2497 = vst [vmem:[#allocation2 + $0x30] sm:$0xff] %v2490
    // Predicated region
    $region30: #{vae_classifier_decoder.1} parent=1 // pred_check
      _
    $region31: #{vae_classifier_decoder.1} parent=1 // pred_check_branch
      %2499 = sbr.rel (0) target = $region33
    $region32: #{vae_classifier_decoder.1} parent=1 // pred_region
      %s2501 = ssub.s32 896, 896
      %2502 = vsyncadd [#allocation3], %s2501
      %s2504 = sshll.u32 [#allocation2], 4
      %s2505 = int_to_ptr.vmem [resolvable:$true] %s2504
      %2507 = dma.vmem_to_hbm [thread:$0]  %s2505, 896, %s7, [#allocation3]
    $region33: #{vae_classifier_decoder.1} parent=1 // pred_fallthru
      _
    // Predicated region
    $region34: #{vae_classifier_decoder.1} parent=1 // pred_check
      _
    $region35: #{vae_classifier_decoder.1} parent=1 // pred_check_branch
      %2509 = sbr.rel (0) target = $region37
    $region36: #{vae_classifier_decoder.1} parent=1 // pred_region
      %2510 = dma.done [#allocation3], 896
    $region37: #{vae_classifier_decoder.1} parent=1 // pred_fallthru
      _
    %2511 = vsyncpa [#allocation3], 1

</llo_original>
